<compile_context>
chip_gen: v7x
topology: tpu7x:2x2x1
jax: 0.10.0
libtpu: 0.0.40
codegen_flags: <defaults>
</compile_context>

<pallas_src>
import functools

import jax
import jax.numpy as jnp
from jax.experimental import pallas as pl
from jax.experimental.pallas import tpu as pltpu

# ----------------------------- Model constants ------------------------------
VOCAB_SIZE = 12        # stand-in for len(i2w)
EMBED_DIM = 32
HIDDEN_SIZE = 16
NUM_LAYERS = 2
PAD_IDX = 0            # stand-in for w2i['.pad']

LANE = 128             # vreg lane width -> lane-dense (unmasked) stores
SUBLANE = 8            # vreg sublane width -> padded batch
GATES = 4 * HIDDEN_SIZE                  # 64 lanes, gate order i | f | g | o

# Row offsets of the packed (non-embedding) weight slab; all multiples of 8.
WHH0_OFF = 0
B0_OFF = WHH0_OFF + HIDDEN_SIZE          # 16
WIH1_OFF = B0_OFF + SUBLANE              # 24
WHH1_OFF = WIH1_OFF + HIDDEN_SIZE        # 40
B1_OFF = WHH1_OFF + HIDDEN_SIZE          # 56
FCW_OFF = B1_OFF + SUBLANE               # 64
FCB_OFF = FCW_OFF + HIDDEN_SIZE          # 80
W_ROWS = FCB_OFF + SUBLANE               # 88


# ------------------------- Fused LSTM(2) + FC kernel -------------------------
def _fused_kernel(B, T, B_PAD, tok_ref, embp_ref, w_ref, out_ref,
                  z0_scr, h_tm_scr, h_bm_scr):
    """Embedding gather + 2-layer LSTM + FC, fully in VMEM.

    tok_ref : (B*T,) int32 in SMEM, batch-major (row b*T + t).
    embp_ref: (VOCAB, 1, LANE) f32 in VMEM; lanes [0,4H) hold emb @ W_ih0.
    w_ref   : (W_ROWS, LANE) f32 in VMEM; packed whh0,b0,wih1,whh1,b1,fcw,fcb.
    out_ref : (B*T, LANE) f32, batch-major logits (lanes >= VOCAB are zero).
    """
    H = HIDDEN_SIZE

    # --- 1. In-kernel embedding gather (rows already projected by W_ih0). ---
    z0_scr[...] = jnp.zeros_like(z0_scr)                  # pad rows -> zeros
    for t in range(T):
        for b in range(B):
            tok = tok_ref[b * T + t]                      # SMEM scalar read
            row = t * B_PAD + b                           # time-major, padded
            z0_scr[row:row + 1, :] = embp_ref[tok]        # dynamic-row VMEM read

    # --- 2. Weights: static views of the packed slab (loaded once). ---
    whh0 = w_ref[WHH0_OFF:WHH0_OFF + H, :GATES]
    b0 = w_ref[B0_OFF:B0_OFF + 1, :GATES]
    wih1 = w_ref[WIH1_OFF:WIH1_OFF + H, :GATES]
    whh1 = w_ref[WHH1_OFF:WHH1_OFF + H, :GATES]
    b1 = w_ref[B1_OFF:B1_OFF + 1, :GATES]
    fcw = w_ref[FCW_OFF:FCW_OFF + H, :]
    fcb = w_ref[FCB_OFF:FCB_OFF + 1, :]

    def run_layer(z_all, whh, emit):
        # z_all: (T*B_PAD, 4H) hoisted input projection (bias included).
        # TODO(synk): amortize the W_hh load across steps with
        # pltpu.matmul_push_rhs / matmul_acc_lhs (MRB-accumulate on v7x);
        # kept as jnp.dot for portability across v5e/v6e/v7x.
        h = jnp.zeros((B_PAD, H), jnp.float32)
        c = jnp.zeros((B_PAD, H), jnp.float32)
        for t in range(T):                                # static, unrolled
            z = z_all[t * B_PAD:(t + 1) * B_PAD, :] + jnp.dot(
                h, whh, preferred_element_type=jnp.float32)     # (B_PAD, 4H)
            sig = jax.nn.sigmoid(z)                       # one wide EUP op (i,f,o)
            g = jnp.tanh(z[:, 2 * H:3 * H])               # g gate
            c = sig[:, H:2 * H] * c + sig[:, 0:H] * g
            h = sig[:, 3 * H:4 * H] * jnp.tanh(c)
            emit(t, h)

    # --- 3. Layer 0: recurrence over the gathered, pre-projected rows. ---
    z0 = z0_scr[:, :GATES] + b0                           # (T*B_PAD, 4H)

    def emit_time_major(t, h):                            # aligned 8-row stores
        h_tm_scr[t * B_PAD:(t + 1) * B_PAD, :] = h

    run_layer(z0, whh0, emit_time_major)

    # --- 4. Layer 1: hoisted input projection over all steps, then recur. ---
    z1 = jnp.dot(h_tm_scr[...], wih1, preferred_element_type=jnp.float32) + b1

    def emit_batch_major(t, h):                           # rows b*T + t
        for b in range(B):
            h_bm_scr[b * T + t, :] = h[b, :]

    run_layer(z1, whh1, emit_batch_major)

    # --- 5. FC projection; batch-major, lane-dense (unmasked) store. ---
    out_ref[...] = jnp.dot(h_bm_scr[...], fcw,
                           preferred_element_type=jnp.float32) + fcb


def _fused_forward(tok_flat, embp, wslab, *, B, T):
    """tok_flat: (B*T,) int32 -> batch-major padded logits (B*T, LANE)."""
    b_pad = max(SUBLANE, ((B + SUBLANE - 1) // SUBLANE) * SUBLANE)
    kernel = functools.partial(_fused_kernel, B, T, b_pad)
    # TODO(synk): for large batches add a leading "parallel" batch grid axis so
    # work shards across v7x's two TensorCores / megacore; at B=2 grid=() wins.
    return pl.pallas_call(
        kernel,
        out_shape=jax.ShapeDtypeStruct((B * T, LANE), jnp.float32),
        grid=(),
        in_specs=[
            pl.BlockSpec(memory_space=pltpu.MemorySpace.SMEM),   # tokens
            pl.BlockSpec(memory_space=pltpu.MemorySpace.VMEM),   # emb @ W_ih0
            pl.BlockSpec(memory_space=pltpu.MemorySpace.VMEM),   # weight slab
        ],
        out_specs=pl.BlockSpec(memory_space=pltpu.MemorySpace.VMEM),
        scratch_shapes=[
            pltpu.VMEM((T * b_pad, LANE), jnp.float32),          # gathered z0
            pltpu.VMEM((T * b_pad, HIDDEN_SIZE), jnp.float32),   # layer-0 h (time-major)
            pltpu.VMEM((B * T, HIDDEN_SIZE), jnp.float32),       # layer-1 h (batch-major)
        ],
    )(tok_flat, embp, wslab)


# ------------------------------ Model wrapper --------------------------------
@jax.jit
def simple_lstm_forward(tokens, embp, wslab):
    """tokens: (B, T) int32 -> logits (B, T, VOCAB_SIZE) f32."""
    B, T = tokens.shape
    tok_flat = tokens.reshape(B * T).astype(jnp.int32)
    logits_pad = _fused_forward(tok_flat, embp, wslab, B=B, T=T)   # (B*T, 128)
    return logits_pad.reshape(B, T, LANE)[:, :, :VOCAB_SIZE]


# --------------------------- Parameter construction --------------------------
def init_params(key):
    """Deterministic synthetic parameters matching the PyTorch module shapes."""
    ks = jax.random.split(key, 3 + 4 * NUM_LAYERS)
    k = iter(ks)
    emb = jax.random.normal(next(k), (VOCAB_SIZE, EMBED_DIM), jnp.float32) * 0.1
    emb = emb.at[PAD_IDX].set(0.0)                        # padding_idx semantics

    scale = 1.0 / (HIDDEN_SIZE ** 0.5)
    layers = []
    for layer in range(NUM_LAYERS):
        din = EMBED_DIM if layer == 0 else HIDDEN_SIZE
        # PyTorch stores (4H, Din); kept pre-transposed (Din, 4H), i|f|g|o order.
        wih = jax.random.uniform(next(k), (din, 4 * HIDDEN_SIZE), jnp.float32,
                                 -scale, scale)
        whh = jax.random.uniform(next(k), (HIDDEN_SIZE, 4 * HIDDEN_SIZE),
                                 jnp.float32, -scale, scale)
        b_ih = jax.random.uniform(next(k), (4 * HIDDEN_SIZE,), jnp.float32,
                                  -scale, scale)
        b_hh = jax.random.uniform(next(k), (4 * HIDDEN_SIZE,), jnp.float32,
                                  -scale, scale)
        layers.append((wih, whh, b_ih + b_hh))            # fold the two biases
    fcw = jax.random.uniform(next(k), (HIDDEN_SIZE, VOCAB_SIZE), jnp.float32,
                             -scale, scale)
    fcb = jax.random.uniform(next(k), (VOCAB_SIZE,), jnp.float32, -scale, scale)
    return emb, layers, fcw, fcb


def pack_params(emb, layers, fcw, fcb):
    """Pack params for the kernel: projected embedding table + one weight slab."""
    (wih0, whh0, bias0), (wih1, whh1, bias1) = layers
    # Fold the layer-0 input projection into the embedding table (exact
    # refactoring: z0_row = emb[tok] @ W_ih0; bias added in-kernel).
    embp = jnp.dot(emb, wih0)                                        # (V, 4H)
    embp_pad = jnp.zeros((VOCAB_SIZE, 1, LANE), jnp.float32)
    embp_pad = embp_pad.at[:, 0, :GATES].set(embp)

    w = jnp.zeros((W_ROWS, LANE), jnp.float32)
    w = w.at[WHH0_OFF:WHH0_OFF + HIDDEN_SIZE, :GATES].set(whh0)
    w = w.at[B0_OFF, :GATES].set(bias0)
    w = w.at[WIH1_OFF:WIH1_OFF + HIDDEN_SIZE, :GATES].set(wih1)
    w = w.at[WHH1_OFF:WHH1_OFF + HIDDEN_SIZE, :GATES].set(whh1)
    w = w.at[B1_OFF, :GATES].set(bias1)
    w = w.at[FCW_OFF:FCW_OFF + HIDDEN_SIZE, :VOCAB_SIZE].set(fcw)
    w = w.at[FCB_OFF, :VOCAB_SIZE].set(fcb)
    return embp_pad, w


# --------------------------- Pure-JAX reference ------------------------------
def reference_forward(tokens, emb, layers, fcw, fcb):
    """Plain JAX re-implementation of the PyTorch module (for validation)."""
    H = HIDDEN_SIZE
    seq = jnp.take(emb, tokens, axis=0)                   # (B, T, E)
    for (wih, whh, bias) in layers:
        Bq, Tq, _ = seq.shape
        h = jnp.zeros((Bq, H), jnp.float32)
        c = jnp.zeros((Bq, H), jnp.float32)
        outs = []
        for t in range(Tq):
            z = seq[:, t, :] @ wih + h @ whh + bias
            i = jax.nn.sigmoid(z[:, 0:H])
            f = jax.nn.sigmoid(z[:, H:2 * H])
            g = jnp.tanh(z[:, 2 * H:3 * H])
            o = jax.nn.sigmoid(z[:, 3 * H:4 * H])
            c = f * c + i * g
            h = o * jnp.tanh(c)
            outs.append(h)
        seq = jnp.stack(outs, axis=1)                     # (B, T, H)
    return seq @ fcw + fcb                                # (B, T, V)


if __name__ == "__main__":
    key = jax.random.PRNGKey(0)
    k_tok, k_par = jax.random.split(key)

    B, T = 2, 8
    tokens = jax.random.randint(k_tok, (B, T), 0, VOCAB_SIZE, dtype=jnp.int32)

    emb, layers, fcw, fcb = init_params(k_par)
    embp_pad, wslab = pack_params(emb, layers, fcw, fcb)

    logits = simple_lstm_forward(tokens, embp_pad, wslab)
    jax.block_until_ready(logits)

    assert logits.shape == (B, T, VOCAB_SIZE)
    assert logits.dtype == jnp.float32
    assert bool(jnp.all(jnp.isfinite(logits)))

    # Numerical check vs. the pure-JAX LSTM reference (tolerance covers MXU
    # f32-matmul pass-precision differences between paths).
    ref = reference_forward(tokens, emb, layers, fcw, fcb)
    max_err = float(jnp.max(jnp.abs(logits - ref)))
    assert max_err < 5e-2, f"mismatch vs reference: max abs err {max_err}"

    print("KERNEL_OK")
</pallas_src>

<mosaic_0001>
module attributes {stable_mosaic.version = 11 : i64} {
  func.func @_fused_kernel(%arg0: memref<16xi32, #tpu.memory_space<smem>>, %arg1: memref<12x1x128xf32, #tpu.memory_space<vmem>>, %arg2: memref<88x128xf32, #tpu.memory_space<vmem>>, %arg3: memref<16x128xf32, #tpu.memory_space<vmem>>, %arg4: memref<64x128xf32, #tpu.memory_space<vmem>>, %arg5: memref<64x16xf32, #tpu.memory_space<vmem>>, %arg6: memref<16x16xf32, #tpu.memory_space<vmem>>) attributes {dimension_semantics = [], scalar_prefetch = 0 : i64, scratch_operands = 3 : i64, tpu.core_type = #tpu.core_type<tc>} {
    %cst = arith.constant 0.000000e+00 : f32
    %0 = vector.broadcast %cst : f32 to vector<64x128xf32>
    %c0 = arith.constant 0 : index
    %c0_0 = arith.constant 0 : index
    %1 = vector.load %arg4[%c0, %c0_0] : memref<64x128xf32, #tpu.memory_space<vmem>>, vector<64x128xf32>
    tpu.vector_store %arg4[%c0, %c0_0], %0 {strides = array<i32>} : memref<64x128xf32, #tpu.memory_space<vmem>>, vector<64x128xf32>,
    %c0_1 = arith.constant 0 : index
    %2 = memref.load %arg0[%c0_1] : memref<16xi32, #tpu.memory_space<smem>>
    %3 = arith.index_cast %2 : i32 to index
    %c0_2 = arith.constant 0 : index
    %c0_3 = arith.constant 0 : index
    %4 = vector.load %arg1[%3, %c0_2, %c0_3] : memref<12x1x128xf32, #tpu.memory_space<vmem>>, vector<1x1x128xf32>
    %5 = vector.shape_cast %4 : vector<1x1x128xf32> to vector<1x128xf32>
    %c0_4 = arith.constant 0 : index
    %c0_5 = arith.constant 0 : index
    %6 = vector.load %arg4[%c0_4, %c0_5] : memref<64x128xf32, #tpu.memory_space<vmem>>, vector<1x128xf32>
    tpu.vector_store %arg4[%c0_4, %c0_5], %5 {strides = array<i32>} : memref<64x128xf32, #tpu.memory_space<vmem>>, vector<1x128xf32>,
    %c8 = arith.constant 8 : index
    %7 = memref.load %arg0[%c8] : memref<16xi32, #tpu.memory_space<smem>>
    %8 = arith.index_cast %7 : i32 to index
    %c0_6 = arith.constant 0 : index
    %c0_7 = arith.constant 0 : index
    %9 = vector.load %arg1[%8, %c0_6, %c0_7] : memref<12x1x128xf32, #tpu.memory_space<vmem>>, vector<1x1x128xf32>
    %10 = vector.shape_cast %9 : vector<1x1x128xf32> to vector<1x128xf32>
    %c1 = arith.constant 1 : index
    %c0_8 = arith.constant 0 : index
    %11 = vector.load %arg4[%c1, %c0_8] : memref<64x128xf32, #tpu.memory_space<vmem>>, vector<1x128xf32>
    tpu.vector_store %arg4[%c1, %c0_8], %10 {strides = array<i32>} : memref<64x128xf32, #tpu.memory_space<vmem>>, vector<1x128xf32>,
    %c1_9 = arith.constant 1 : index
    %12 = memref.load %arg0[%c1_9] : memref<16xi32, #tpu.memory_space<smem>>
    %13 = arith.index_cast %12 : i32 to index
    %c0_10 = arith.constant 0 : index
    %c0_11 = arith.constant 0 : index
    %14 = vector.load %arg1[%13, %c0_10, %c0_11] : memref<12x1x128xf32, #tpu.memory_space<vmem>>, vector<1x1x128xf32>
    %15 = vector.shape_cast %14 : vector<1x1x128xf32> to vector<1x128xf32>
    %c8_12 = arith.constant 8 : index
    %c0_13 = arith.constant 0 : index
    %16 = vector.load %arg4[%c8_12, %c0_13] : memref<64x128xf32, #tpu.memory_space<vmem>>, vector<1x128xf32>
    tpu.vector_store %arg4[%c8_12, %c0_13], %15 {strides = array<i32>} : memref<64x128xf32, #tpu.memory_space<vmem>>, vector<1x128xf32>,
    %c9 = arith.constant 9 : index
    %17 = memref.load %arg0[%c9] : memref<16xi32, #tpu.memory_space<smem>>
    %18 = arith.index_cast %17 : i32 to index
    %c0_14 = arith.constant 0 : index
    %c0_15 = arith.constant 0 : index
    %19 = vector.load %arg1[%18, %c0_14, %c0_15] : memref<12x1x128xf32, #tpu.memory_space<vmem>>, vector<1x1x128xf32>
    %20 = vector.shape_cast %19 : vector<1x1x128xf32> to vector<1x128xf32>
    %c9_16 = arith.constant 9 : index
    %c0_17 = arith.constant 0 : index
    %21 = vector.load %arg4[%c9_16, %c0_17] : memref<64x128xf32, #tpu.memory_space<vmem>>, vector<1x128xf32>
    tpu.vector_store %arg4[%c9_16, %c0_17], %20 {strides = array<i32>} : memref<64x128xf32, #tpu.memory_space<vmem>>, vector<1x128xf32>,
    %c2 = arith.constant 2 : index
    %22 = memref.load %arg0[%c2] : memref<16xi32, #tpu.memory_space<smem>>
    %23 = arith.index_cast %22 : i32 to index
    %c0_18 = arith.constant 0 : index
    %c0_19 = arith.constant 0 : index
    %24 = vector.load %arg1[%23, %c0_18, %c0_19] : memref<12x1x128xf32, #tpu.memory_space<vmem>>, vector<1x1x128xf32>
    %25 = vector.shape_cast %24 : vector<1x1x128xf32> to vector<1x128xf32>
    %c16 = arith.constant 16 : index
    %c0_20 = arith.constant 0 : index
    %26 = vector.load %arg4[%c16, %c0_20] : memref<64x128xf32, #tpu.memory_space<vmem>>, vector<1x128xf32>
    tpu.vector_store %arg4[%c16, %c0_20], %25 {strides = array<i32>} : memref<64x128xf32, #tpu.memory_space<vmem>>, vector<1x128xf32>,
    %c10 = arith.constant 10 : index
    %27 = memref.load %arg0[%c10] : memref<16xi32, #tpu.memory_space<smem>>
    %28 = arith.index_cast %27 : i32 to index
    %c0_21 = arith.constant 0 : index
    %c0_22 = arith.constant 0 : index
    %29 = vector.load %arg1[%28, %c0_21, %c0_22] : memref<12x1x128xf32, #tpu.memory_space<vmem>>, vector<1x1x128xf32>
    %30 = vector.shape_cast %29 : vector<1x1x128xf32> to vector<1x128xf32>
    %c17 = arith.constant 17 : index
    %c0_23 = arith.constant 0 : index
    %31 = vector.load %arg4[%c17, %c0_23] : memref<64x128xf32, #tpu.memory_space<vmem>>, vector<1x128xf32>
    tpu.vector_store %arg4[%c17, %c0_23], %30 {strides = array<i32>} : memref<64x128xf32, #tpu.memory_space<vmem>>, vector<1x128xf32>,
    %c3 = arith.constant 3 : index
    %32 = memref.load %arg0[%c3] : memref<16xi32, #tpu.memory_space<smem>>
    %33 = arith.index_cast %32 : i32 to index
    %c0_24 = arith.constant 0 : index
    %c0_25 = arith.constant 0 : index
    %34 = vector.load %arg1[%33, %c0_24, %c0_25] : memref<12x1x128xf32, #tpu.memory_space<vmem>>, vector<1x1x128xf32>
    %35 = vector.shape_cast %34 : vector<1x1x128xf32> to vector<1x128xf32>
    %c24 = arith.constant 24 : index
    %c0_26 = arith.constant 0 : index
    %36 = vector.load %arg4[%c24, %c0_26] : memref<64x128xf32, #tpu.memory_space<vmem>>, vector<1x128xf32>
    tpu.vector_store %arg4[%c24, %c0_26], %35 {strides = array<i32>} : memref<64x128xf32, #tpu.memory_space<vmem>>, vector<1x128xf32>,
    %c11 = arith.constant 11 : index
    %37 = memref.load %arg0[%c11] : memref<16xi32, #tpu.memory_space<smem>>
    %38 = arith.index_cast %37 : i32 to index
    %c0_27 = arith.constant 0 : index
    %c0_28 = arith.constant 0 : index
    %39 = vector.load %arg1[%38, %c0_27, %c0_28] : memref<12x1x128xf32, #tpu.memory_space<vmem>>, vector<1x1x128xf32>
    %40 = vector.shape_cast %39 : vector<1x1x128xf32> to vector<1x128xf32>
    %c25 = arith.constant 25 : index
    %c0_29 = arith.constant 0 : index
    %41 = vector.load %arg4[%c25, %c0_29] : memref<64x128xf32, #tpu.memory_space<vmem>>, vector<1x128xf32>
    tpu.vector_store %arg4[%c25, %c0_29], %40 {strides = array<i32>} : memref<64x128xf32, #tpu.memory_space<vmem>>, vector<1x128xf32>,
    %c4 = arith.constant 4 : index
    %42 = memref.load %arg0[%c4] : memref<16xi32, #tpu.memory_space<smem>>
    %43 = arith.index_cast %42 : i32 to index
    %c0_30 = arith.constant 0 : index
    %c0_31 = arith.constant 0 : index
    %44 = vector.load %arg1[%43, %c0_30, %c0_31] : memref<12x1x128xf32, #tpu.memory_space<vmem>>, vector<1x1x128xf32>
    %45 = vector.shape_cast %44 : vector<1x1x128xf32> to vector<1x128xf32>
    %c32 = arith.constant 32 : index
    %c0_32 = arith.constant 0 : index
    %46 = vector.load %arg4[%c32, %c0_32] : memref<64x128xf32, #tpu.memory_space<vmem>>, vector<1x128xf32>
    tpu.vector_store %arg4[%c32, %c0_32], %45 {strides = array<i32>} : memref<64x128xf32, #tpu.memory_space<vmem>>, vector<1x128xf32>,
    %c12 = arith.constant 12 : index
    %47 = memref.load %arg0[%c12] : memref<16xi32, #tpu.memory_space<smem>>
    %48 = arith.index_cast %47 : i32 to index
    %c0_33 = arith.constant 0 : index
    %c0_34 = arith.constant 0 : index
    %49 = vector.load %arg1[%48, %c0_33, %c0_34] : memref<12x1x128xf32, #tpu.memory_space<vmem>>, vector<1x1x128xf32>
    %50 = vector.shape_cast %49 : vector<1x1x128xf32> to vector<1x128xf32>
    %c33 = arith.constant 33 : index
    %c0_35 = arith.constant 0 : index
    %51 = vector.load %arg4[%c33, %c0_35] : memref<64x128xf32, #tpu.memory_space<vmem>>, vector<1x128xf32>
    tpu.vector_store %arg4[%c33, %c0_35], %50 {strides = array<i32>} : memref<64x128xf32, #tpu.memory_space<vmem>>, vector<1x128xf32>,
    %c5 = arith.constant 5 : index
    %52 = memref.load %arg0[%c5] : memref<16xi32, #tpu.memory_space<smem>>
    %53 = arith.index_cast %52 : i32 to index
    %c0_36 = arith.constant 0 : index
    %c0_37 = arith.constant 0 : index
    %54 = vector.load %arg1[%53, %c0_36, %c0_37] : memref<12x1x128xf32, #tpu.memory_space<vmem>>, vector<1x1x128xf32>
    %55 = vector.shape_cast %54 : vector<1x1x128xf32> to vector<1x128xf32>
    %c40 = arith.constant 40 : index
    %c0_38 = arith.constant 0 : index
    %56 = vector.load %arg4[%c40, %c0_38] : memref<64x128xf32, #tpu.memory_space<vmem>>, vector<1x128xf32>
    tpu.vector_store %arg4[%c40, %c0_38], %55 {strides = array<i32>} : memref<64x128xf32, #tpu.memory_space<vmem>>, vector<1x128xf32>,
    %c13 = arith.constant 13 : index
    %57 = memref.load %arg0[%c13] : memref<16xi32, #tpu.memory_space<smem>>
    %58 = arith.index_cast %57 : i32 to index
    %c0_39 = arith.constant 0 : index
    %c0_40 = arith.constant 0 : index
    %59 = vector.load %arg1[%58, %c0_39, %c0_40] : memref<12x1x128xf32, #tpu.memory_space<vmem>>, vector<1x1x128xf32>
    %60 = vector.shape_cast %59 : vector<1x1x128xf32> to vector<1x128xf32>
    %c41 = arith.constant 41 : index
    %c0_41 = arith.constant 0 : index
    %61 = vector.load %arg4[%c41, %c0_41] : memref<64x128xf32, #tpu.memory_space<vmem>>, vector<1x128xf32>
    tpu.vector_store %arg4[%c41, %c0_41], %60 {strides = array<i32>} : memref<64x128xf32, #tpu.memory_space<vmem>>, vector<1x128xf32>,
    %c6 = arith.constant 6 : index
    %62 = memref.load %arg0[%c6] : memref<16xi32, #tpu.memory_space<smem>>
    %63 = arith.index_cast %62 : i32 to index
    %c0_42 = arith.constant 0 : index
    %c0_43 = arith.constant 0 : index
    %64 = vector.load %arg1[%63, %c0_42, %c0_43] : memref<12x1x128xf32, #tpu.memory_space<vmem>>, vector<1x1x128xf32>
    %65 = vector.shape_cast %64 : vector<1x1x128xf32> to vector<1x128xf32>
    %c48 = arith.constant 48 : index
    %c0_44 = arith.constant 0 : index
    %66 = vector.load %arg4[%c48, %c0_44] : memref<64x128xf32, #tpu.memory_space<vmem>>, vector<1x128xf32>
    tpu.vector_store %arg4[%c48, %c0_44], %65 {strides = array<i32>} : memref<64x128xf32, #tpu.memory_space<vmem>>, vector<1x128xf32>,
    %c14 = arith.constant 14 : index
    %67 = memref.load %arg0[%c14] : memref<16xi32, #tpu.memory_space<smem>>
    %68 = arith.index_cast %67 : i32 to index
    %c0_45 = arith.constant 0 : index
    %c0_46 = arith.constant 0 : index
    %69 = vector.load %arg1[%68, %c0_45, %c0_46] : memref<12x1x128xf32, #tpu.memory_space<vmem>>, vector<1x1x128xf32>
    %70 = vector.shape_cast %69 : vector<1x1x128xf32> to vector<1x128xf32>
    %c49 = arith.constant 49 : index
    %c0_47 = arith.constant 0 : index
    %71 = vector.load %arg4[%c49, %c0_47] : memref<64x128xf32, #tpu.memory_space<vmem>>, vector<1x128xf32>
    tpu.vector_store %arg4[%c49, %c0_47], %70 {strides = array<i32>} : memref<64x128xf32, #tpu.memory_space<vmem>>, vector<1x128xf32>,
    %c7 = arith.constant 7 : index
    %72 = memref.load %arg0[%c7] : memref<16xi32, #tpu.memory_space<smem>>
    %73 = arith.index_cast %72 : i32 to index
    %c0_48 = arith.constant 0 : index
    %c0_49 = arith.constant 0 : index
    %74 = vector.load %arg1[%73, %c0_48, %c0_49] : memref<12x1x128xf32, #tpu.memory_space<vmem>>, vector<1x1x128xf32>
    %75 = vector.shape_cast %74 : vector<1x1x128xf32> to vector<1x128xf32>
    %c56 = arith.constant 56 : index
    %c0_50 = arith.constant 0 : index
    %76 = vector.load %arg4[%c56, %c0_50] : memref<64x128xf32, #tpu.memory_space<vmem>>, vector<1x128xf32>
    tpu.vector_store %arg4[%c56, %c0_50], %75 {strides = array<i32>} : memref<64x128xf32, #tpu.memory_space<vmem>>, vector<1x128xf32>,
    %c15 = arith.constant 15 : index
    %77 = memref.load %arg0[%c15] : memref<16xi32, #tpu.memory_space<smem>>
    %78 = arith.index_cast %77 : i32 to index
    %c0_51 = arith.constant 0 : index
    %c0_52 = arith.constant 0 : index
    %79 = vector.load %arg1[%78, %c0_51, %c0_52] : memref<12x1x128xf32, #tpu.memory_space<vmem>>, vector<1x1x128xf32>
    %80 = vector.shape_cast %79 : vector<1x1x128xf32> to vector<1x128xf32>
    %c57 = arith.constant 57 : index
    %c0_53 = arith.constant 0 : index
    %81 = vector.load %arg4[%c57, %c0_53] : memref<64x128xf32, #tpu.memory_space<vmem>>, vector<1x128xf32>
    tpu.vector_store %arg4[%c57, %c0_53], %80 {strides = array<i32>} : memref<64x128xf32, #tpu.memory_space<vmem>>, vector<1x128xf32>,
    %c0_54 = arith.constant 0 : index
    %c0_55 = arith.constant 0 : index
    %82 = vector.load %arg2[%c0_54, %c0_55] : memref<88x128xf32, #tpu.memory_space<vmem>>, vector<16x64xf32>
    %c16_56 = arith.constant 16 : index
    %c0_57 = arith.constant 0 : index
    %83 = vector.load %arg2[%c16_56, %c0_57] : memref<88x128xf32, #tpu.memory_space<vmem>>, vector<1x64xf32>
    %c24_58 = arith.constant 24 : index
    %c0_59 = arith.constant 0 : index
    %84 = vector.load %arg2[%c24_58, %c0_59] : memref<88x128xf32, #tpu.memory_space<vmem>>, vector<16x64xf32>
    %c40_60 = arith.constant 40 : index
    %c0_61 = arith.constant 0 : index
    %85 = vector.load %arg2[%c40_60, %c0_61] : memref<88x128xf32, #tpu.memory_space<vmem>>, vector<16x64xf32>
    %c56_62 = arith.constant 56 : index
    %c0_63 = arith.constant 0 : index
    %86 = vector.load %arg2[%c56_62, %c0_63] : memref<88x128xf32, #tpu.memory_space<vmem>>, vector<1x64xf32>
    %c64 = arith.constant 64 : index
    %c0_64 = arith.constant 0 : index
    %87 = vector.load %arg2[%c64, %c0_64] : memref<88x128xf32, #tpu.memory_space<vmem>>, vector<16x128xf32>
    %c80 = arith.constant 80 : index
    %c0_65 = arith.constant 0 : index
    %88 = vector.load %arg2[%c80, %c0_65] : memref<88x128xf32, #tpu.memory_space<vmem>>, vector<1x128xf32>
    %c0_66 = arith.constant 0 : index
    %c0_67 = arith.constant 0 : index
    %89 = vector.load %arg4[%c0_66, %c0_67] : memref<64x128xf32, #tpu.memory_space<vmem>>, vector<64x64xf32>
    %90 = vector.broadcast %83 : vector<1x64xf32> to vector<64x64xf32>
    %91 = arith.addf %89, %90 : vector<64x64xf32>
    %cst_68 = arith.constant 0.000000e+00 : f32
    %92 = vector.broadcast %cst_68 : f32 to vector<8x16xf32>
    %cst_69 = arith.constant 0.000000e+00 : f32
    %93 = vector.broadcast %cst_69 : f32 to vector<8x16xf32>
    %94 = vector.extract_strided_slice %91 {offsets = [0, 0], sizes = [8, 64], strides = [1, 1]} : vector<64x64xf32> to vector<8x64xf32>
    %cst_70 = arith.constant dense<0.000000e+00> : vector<8x64xf32>
    %95 = tpu.matmul %92, %82, %cst_70 {dimension_numbers = #tpu.dot_dimension_numbers<[1], [0], [0], [1], [0, 0, 1, 1], [], []>} : vector<8x16xf32>, vector<16x64xf32>, vector<8x64xf32> -> vector<8x64xf32>
    %96 = arith.addf %94, %95 : vector<8x64xf32>
    %97 = arith.negf %96 : vector<8x64xf32>
    %98 = math.exp %97 : vector<8x64xf32>
    %cst_71 = arith.constant 1.000000e+00 : f32
    %99 = vector.broadcast %cst_71 : f32 to vector<8x64xf32>
    %100 = arith.addf %99, %98 : vector<8x64xf32>
    %101 = arith.divf %99, %100 : vector<8x64xf32>
    %102 = vector.extract_strided_slice %96 {offsets = [0, 32], sizes = [8, 16], strides = [1, 1]} : vector<8x64xf32> to vector<8x16xf32>
    %103 = math.tanh %102 : vector<8x16xf32>
    %104 = vector.extract_strided_slice %101 {offsets = [0, 16], sizes = [8, 16], strides = [1, 1]} : vector<8x64xf32> to vector<8x16xf32>
    %105 = arith.mulf %104, %93 : vector<8x16xf32>
    %106 = vector.extract_strided_slice %101 {offsets = [0, 0], sizes = [8, 16], strides = [1, 1]} : vector<8x64xf32> to vector<8x16xf32>
    %107 = arith.mulf %106, %103 : vector<8x16xf32>
    %108 = arith.addf %105, %107 : vector<8x16xf32>
    %109 = vector.extract_strided_slice %101 {offsets = [0, 48], sizes = [8, 16], strides = [1, 1]} : vector<8x64xf32> to vector<8x16xf32>
    %110 = math.tanh %108 : vector<8x16xf32>
    %111 = arith.mulf %109, %110 : vector<8x16xf32>
    %c0_72 = arith.constant 0 : index
    %c0_73 = arith.constant 0 : index
    %112 = vector.load %arg5[%c0_72, %c0_73] : memref<64x16xf32, #tpu.memory_space<vmem>>, vector<8x16xf32>
    tpu.vector_store %arg5[%c0_72, %c0_73], %111 {strides = array<i32>} : memref<64x16xf32, #tpu.memory_space<vmem>>, vector<8x16xf32>,
    %113 = vector.extract_strided_slice %91 {offsets = [8, 0], sizes = [8, 64], strides = [1, 1]} : vector<64x64xf32> to vector<8x64xf32>
    %cst_74 = arith.constant dense<0.000000e+00> : vector<8x64xf32>
    %114 = tpu.matmul %111, %82, %cst_74 {dimension_numbers = #tpu.dot_dimension_numbers<[1], [0], [0], [1], [0, 0, 1, 1], [], []>} : vector<8x16xf32>, vector<16x64xf32>, vector<8x64xf32> -> vector<8x64xf32>
    %115 = arith.addf %113, %114 : vector<8x64xf32>
    %116 = arith.negf %115 : vector<8x64xf32>
    %117 = math.exp %116 : vector<8x64xf32>
    %cst_75 = arith.constant 1.000000e+00 : f32
    %118 = vector.broadcast %cst_75 : f32 to vector<8x64xf32>
    %119 = arith.addf %118, %117 : vector<8x64xf32>
    %120 = arith.divf %118, %119 : vector<8x64xf32>
    %121 = vector.extract_strided_slice %115 {offsets = [0, 32], sizes = [8, 16], strides = [1, 1]} : vector<8x64xf32> to vector<8x16xf32>
    %122 = math.tanh %121 : vector<8x16xf32>
    %123 = vector.extract_strided_slice %120 {offsets = [0, 16], sizes = [8, 16], strides = [1, 1]} : vector<8x64xf32> to vector<8x16xf32>
    %124 = arith.mulf %123, %108 : vector<8x16xf32>
    %125 = vector.extract_strided_slice %120 {offsets = [0, 0], sizes = [8, 16], strides = [1, 1]} : vector<8x64xf32> to vector<8x16xf32>
    %126 = arith.mulf %125, %122 : vector<8x16xf32>
    %127 = arith.addf %124, %126 : vector<8x16xf32>
    %128 = vector.extract_strided_slice %120 {offsets = [0, 48], sizes = [8, 16], strides = [1, 1]} : vector<8x64xf32> to vector<8x16xf32>
    %129 = math.tanh %127 : vector<8x16xf32>
    %130 = arith.mulf %128, %129 : vector<8x16xf32>
    %c8_76 = arith.constant 8 : index
    %c0_77 = arith.constant 0 : index
    %131 = vector.load %arg5[%c8_76, %c0_77] : memref<64x16xf32, #tpu.memory_space<vmem>>, vector<8x16xf32>
    tpu.vector_store %arg5[%c8_76, %c0_77], %130 {strides = array<i32>} : memref<64x16xf32, #tpu.memory_space<vmem>>, vector<8x16xf32>,
    %132 = vector.extract_strided_slice %91 {offsets = [16, 0], sizes = [8, 64], strides = [1, 1]} : vector<64x64xf32> to vector<8x64xf32>
    %cst_78 = arith.constant dense<0.000000e+00> : vector<8x64xf32>
    %133 = tpu.matmul %130, %82, %cst_78 {dimension_numbers = #tpu.dot_dimension_numbers<[1], [0], [0], [1], [0, 0, 1, 1], [], []>} : vector<8x16xf32>, vector<16x64xf32>, vector<8x64xf32> -> vector<8x64xf32>
    %134 = arith.addf %132, %133 : vector<8x64xf32>
    %135 = arith.negf %134 : vector<8x64xf32>
    %136 = math.exp %135 : vector<8x64xf32>
    %cst_79 = arith.constant 1.000000e+00 : f32
    %137 = vector.broadcast %cst_79 : f32 to vector<8x64xf32>
    %138 = arith.addf %137, %136 : vector<8x64xf32>
    %139 = arith.divf %137, %138 : vector<8x64xf32>
    %140 = vector.extract_strided_slice %134 {offsets = [0, 32], sizes = [8, 16], strides = [1, 1]} : vector<8x64xf32> to vector<8x16xf32>
    %141 = math.tanh %140 : vector<8x16xf32>
    %142 = vector.extract_strided_slice %139 {offsets = [0, 16], sizes = [8, 16], strides = [1, 1]} : vector<8x64xf32> to vector<8x16xf32>
    %143 = arith.mulf %142, %127 : vector<8x16xf32>
    %144 = vector.extract_strided_slice %139 {offsets = [0, 0], sizes = [8, 16], strides = [1, 1]} : vector<8x64xf32> to vector<8x16xf32>
    %145 = arith.mulf %144, %141 : vector<8x16xf32>
    %146 = arith.addf %143, %145 : vector<8x16xf32>
    %147 = vector.extract_strided_slice %139 {offsets = [0, 48], sizes = [8, 16], strides = [1, 1]} : vector<8x64xf32> to vector<8x16xf32>
    %148 = math.tanh %146 : vector<8x16xf32>
    %149 = arith.mulf %147, %148 : vector<8x16xf32>
    %c16_80 = arith.constant 16 : index
    %c0_81 = arith.constant 0 : index
    %150 = vector.load %arg5[%c16_80, %c0_81] : memref<64x16xf32, #tpu.memory_space<vmem>>, vector<8x16xf32>
    tpu.vector_store %arg5[%c16_80, %c0_81], %149 {strides = array<i32>} : memref<64x16xf32, #tpu.memory_space<vmem>>, vector<8x16xf32>,
    %151 = vector.extract_strided_slice %91 {offsets = [24, 0], sizes = [8, 64], strides = [1, 1]} : vector<64x64xf32> to vector<8x64xf32>
    %cst_82 = arith.constant dense<0.000000e+00> : vector<8x64xf32>
    %152 = tpu.matmul %149, %82, %cst_82 {dimension_numbers = #tpu.dot_dimension_numbers<[1], [0], [0], [1], [0, 0, 1, 1], [], []>} : vector<8x16xf32>, vector<16x64xf32>, vector<8x64xf32> -> vector<8x64xf32>
    %153 = arith.addf %151, %152 : vector<8x64xf32>
    %154 = arith.negf %153 : vector<8x64xf32>
    %155 = math.exp %154 : vector<8x64xf32>
    %cst_83 = arith.constant 1.000000e+00 : f32
    %156 = vector.broadcast %cst_83 : f32 to vector<8x64xf32>
    %157 = arith.addf %156, %155 : vector<8x64xf32>
    %158 = arith.divf %156, %157 : vector<8x64xf32>
    %159 = vector.extract_strided_slice %153 {offsets = [0, 32], sizes = [8, 16], strides = [1, 1]} : vector<8x64xf32> to vector<8x16xf32>
    %160 = math.tanh %159 : vector<8x16xf32>
    %161 = vector.extract_strided_slice %158 {offsets = [0, 16], sizes = [8, 16], strides = [1, 1]} : vector<8x64xf32> to vector<8x16xf32>
    %162 = arith.mulf %161, %146 : vector<8x16xf32>
    %163 = vector.extract_strided_slice %158 {offsets = [0, 0], sizes = [8, 16], strides = [1, 1]} : vector<8x64xf32> to vector<8x16xf32>
    %164 = arith.mulf %163, %160 : vector<8x16xf32>
    %165 = arith.addf %162, %164 : vector<8x16xf32>
    %166 = vector.extract_strided_slice %158 {offsets = [0, 48], sizes = [8, 16], strides = [1, 1]} : vector<8x64xf32> to vector<8x16xf32>
    %167 = math.tanh %165 : vector<8x16xf32>
    %168 = arith.mulf %166, %167 : vector<8x16xf32>
    %c24_84 = arith.constant 24 : index
    %c0_85 = arith.constant 0 : index
    %169 = vector.load %arg5[%c24_84, %c0_85] : memref<64x16xf32, #tpu.memory_space<vmem>>, vector<8x16xf32>
    tpu.vector_store %arg5[%c24_84, %c0_85], %168 {strides = array<i32>} : memref<64x16xf32, #tpu.memory_space<vmem>>, vector<8x16xf32>,
    %170 = vector.extract_strided_slice %91 {offsets = [32, 0], sizes = [8, 64], strides = [1, 1]} : vector<64x64xf32> to vector<8x64xf32>
    %cst_86 = arith.constant dense<0.000000e+00> : vector<8x64xf32>
    %171 = tpu.matmul %168, %82, %cst_86 {dimension_numbers = #tpu.dot_dimension_numbers<[1], [0], [0], [1], [0, 0, 1, 1], [], []>} : vector<8x16xf32>, vector<16x64xf32>, vector<8x64xf32> -> vector<8x64xf32>
    %172 = arith.addf %170, %171 : vector<8x64xf32>
    %173 = arith.negf %172 : vector<8x64xf32>
    %174 = math.exp %173 : vector<8x64xf32>
    %cst_87 = arith.constant 1.000000e+00 : f32
    %175 = vector.broadcast %cst_87 : f32 to vector<8x64xf32>
    %176 = arith.addf %175, %174 : vector<8x64xf32>
    %177 = arith.divf %175, %176 : vector<8x64xf32>
    %178 = vector.extract_strided_slice %172 {offsets = [0, 32], sizes = [8, 16], strides = [1, 1]} : vector<8x64xf32> to vector<8x16xf32>
    %179 = math.tanh %178 : vector<8x16xf32>
    %180 = vector.extract_strided_slice %177 {offsets = [0, 16], sizes = [8, 16], strides = [1, 1]} : vector<8x64xf32> to vector<8x16xf32>
    %181 = arith.mulf %180, %165 : vector<8x16xf32>
    %182 = vector.extract_strided_slice %177 {offsets = [0, 0], sizes = [8, 16], strides = [1, 1]} : vector<8x64xf32> to vector<8x16xf32>
    %183 = arith.mulf %182, %179 : vector<8x16xf32>
    %184 = arith.addf %181, %183 : vector<8x16xf32>
    %185 = vector.extract_strided_slice %177 {offsets = [0, 48], sizes = [8, 16], strides = [1, 1]} : vector<8x64xf32> to vector<8x16xf32>
    %186 = math.tanh %184 : vector<8x16xf32>
    %187 = arith.mulf %185, %186 : vector<8x16xf32>
    %c32_88 = arith.constant 32 : index
    %c0_89 = arith.constant 0 : index
    %188 = vector.load %arg5[%c32_88, %c0_89] : memref<64x16xf32, #tpu.memory_space<vmem>>, vector<8x16xf32>
    tpu.vector_store %arg5[%c32_88, %c0_89], %187 {strides = array<i32>} : memref<64x16xf32, #tpu.memory_space<vmem>>, vector<8x16xf32>,
    %189 = vector.extract_strided_slice %91 {offsets = [40, 0], sizes = [8, 64], strides = [1, 1]} : vector<64x64xf32> to vector<8x64xf32>
    %cst_90 = arith.constant dense<0.000000e+00> : vector<8x64xf32>
    %190 = tpu.matmul %187, %82, %cst_90 {dimension_numbers = #tpu.dot_dimension_numbers<[1], [0], [0], [1], [0, 0, 1, 1], [], []>} : vector<8x16xf32>, vector<16x64xf32>, vector<8x64xf32> -> vector<8x64xf32>
    %191 = arith.addf %189, %190 : vector<8x64xf32>
    %192 = arith.negf %191 : vector<8x64xf32>
    %193 = math.exp %192 : vector<8x64xf32>
    %cst_91 = arith.constant 1.000000e+00 : f32
    %194 = vector.broadcast %cst_91 : f32 to vector<8x64xf32>
    %195 = arith.addf %194, %193 : vector<8x64xf32>
    %196 = arith.divf %194, %195 : vector<8x64xf32>
    %197 = vector.extract_strided_slice %191 {offsets = [0, 32], sizes = [8, 16], strides = [1, 1]} : vector<8x64xf32> to vector<8x16xf32>
    %198 = math.tanh %197 : vector<8x16xf32>
    %199 = vector.extract_strided_slice %196 {offsets = [0, 16], sizes = [8, 16], strides = [1, 1]} : vector<8x64xf32> to vector<8x16xf32>
    %200 = arith.mulf %199, %184 : vector<8x16xf32>
    %201 = vector.extract_strided_slice %196 {offsets = [0, 0], sizes = [8, 16], strides = [1, 1]} : vector<8x64xf32> to vector<8x16xf32>
    %202 = arith.mulf %201, %198 : vector<8x16xf32>
    %203 = arith.addf %200, %202 : vector<8x16xf32>
    %204 = vector.extract_strided_slice %196 {offsets = [0, 48], sizes = [8, 16], strides = [1, 1]} : vector<8x64xf32> to vector<8x16xf32>
    %205 = math.tanh %203 : vector<8x16xf32>
    %206 = arith.mulf %204, %205 : vector<8x16xf32>
    %c40_92 = arith.constant 40 : index
    %c0_93 = arith.constant 0 : index
    %207 = vector.load %arg5[%c40_92, %c0_93] : memref<64x16xf32, #tpu.memory_space<vmem>>, vector<8x16xf32>
    tpu.vector_store %arg5[%c40_92, %c0_93], %206 {strides = array<i32>} : memref<64x16xf32, #tpu.memory_space<vmem>>, vector<8x16xf32>,
    %208 = vector.extract_strided_slice %91 {offsets = [48, 0], sizes = [8, 64], strides = [1, 1]} : vector<64x64xf32> to vector<8x64xf32>
    %cst_94 = arith.constant dense<0.000000e+00> : vector<8x64xf32>
    %209 = tpu.matmul %206, %82, %cst_94 {dimension_numbers = #tpu.dot_dimension_numbers<[1], [0], [0], [1], [0, 0, 1, 1], [], []>} : vector<8x16xf32>, vector<16x64xf32>, vector<8x64xf32> -> vector<8x64xf32>
    %210 = arith.addf %208, %209 : vector<8x64xf32>
    %211 = arith.negf %210 : vector<8x64xf32>
    %212 = math.exp %211 : vector<8x64xf32>
    %cst_95 = arith.constant 1.000000e+00 : f32
    %213 = vector.broadcast %cst_95 : f32 to vector<8x64xf32>
    %214 = arith.addf %213, %212 : vector<8x64xf32>
    %215 = arith.divf %213, %214 : vector<8x64xf32>
    %216 = vector.extract_strided_slice %210 {offsets = [0, 32], sizes = [8, 16], strides = [1, 1]} : vector<8x64xf32> to vector<8x16xf32>
    %217 = math.tanh %216 : vector<8x16xf32>
    %218 = vector.extract_strided_slice %215 {offsets = [0, 16], sizes = [8, 16], strides = [1, 1]} : vector<8x64xf32> to vector<8x16xf32>
    %219 = arith.mulf %218, %203 : vector<8x16xf32>
    %220 = vector.extract_strided_slice %215 {offsets = [0, 0], sizes = [8, 16], strides = [1, 1]} : vector<8x64xf32> to vector<8x16xf32>
    %221 = arith.mulf %220, %217 : vector<8x16xf32>
    %222 = arith.addf %219, %221 : vector<8x16xf32>
    %223 = vector.extract_strided_slice %215 {offsets = [0, 48], sizes = [8, 16], strides = [1, 1]} : vector<8x64xf32> to vector<8x16xf32>
    %224 = math.tanh %222 : vector<8x16xf32>
    %225 = arith.mulf %223, %224 : vector<8x16xf32>
    %c48_96 = arith.constant 48 : index
    %c0_97 = arith.constant 0 : index
    %226 = vector.load %arg5[%c48_96, %c0_97] : memref<64x16xf32, #tpu.memory_space<vmem>>, vector<8x16xf32>
    tpu.vector_store %arg5[%c48_96, %c0_97], %225 {strides = array<i32>} : memref<64x16xf32, #tpu.memory_space<vmem>>, vector<8x16xf32>,
    %227 = vector.extract_strided_slice %91 {offsets = [56, 0], sizes = [8, 64], strides = [1, 1]} : vector<64x64xf32> to vector<8x64xf32>
    %cst_98 = arith.constant dense<0.000000e+00> : vector<8x64xf32>
    %228 = tpu.matmul %225, %82, %cst_98 {dimension_numbers = #tpu.dot_dimension_numbers<[1], [0], [0], [1], [0, 0, 1, 1], [], []>} : vector<8x16xf32>, vector<16x64xf32>, vector<8x64xf32> -> vector<8x64xf32>
    %229 = arith.addf %227, %228 : vector<8x64xf32>
    %230 = arith.negf %229 : vector<8x64xf32>
    %231 = math.exp %230 : vector<8x64xf32>
    %cst_99 = arith.constant 1.000000e+00 : f32
    %232 = vector.broadcast %cst_99 : f32 to vector<8x64xf32>
    %233 = arith.addf %232, %231 : vector<8x64xf32>
    %234 = arith.divf %232, %233 : vector<8x64xf32>
    %235 = vector.extract_strided_slice %229 {offsets = [0, 32], sizes = [8, 16], strides = [1, 1]} : vector<8x64xf32> to vector<8x16xf32>
    %236 = math.tanh %235 : vector<8x16xf32>
    %237 = vector.extract_strided_slice %234 {offsets = [0, 16], sizes = [8, 16], strides = [1, 1]} : vector<8x64xf32> to vector<8x16xf32>
    %238 = arith.mulf %237, %222 : vector<8x16xf32>
    %239 = vector.extract_strided_slice %234 {offsets = [0, 0], sizes = [8, 16], strides = [1, 1]} : vector<8x64xf32> to vector<8x16xf32>
    %240 = arith.mulf %239, %236 : vector<8x16xf32>
    %241 = arith.addf %238, %240 : vector<8x16xf32>
    %242 = vector.extract_strided_slice %234 {offsets = [0, 48], sizes = [8, 16], strides = [1, 1]} : vector<8x64xf32> to vector<8x16xf32>
    %243 = math.tanh %241 : vector<8x16xf32>
    %244 = arith.mulf %242, %243 : vector<8x16xf32>
    %c56_100 = arith.constant 56 : index
    %c0_101 = arith.constant 0 : index
    %245 = vector.load %arg5[%c56_100, %c0_101] : memref<64x16xf32, #tpu.memory_space<vmem>>, vector<8x16xf32>
    tpu.vector_store %arg5[%c56_100, %c0_101], %244 {strides = array<i32>} : memref<64x16xf32, #tpu.memory_space<vmem>>, vector<8x16xf32>,
    %c0_102 = arith.constant 0 : index
    %c0_103 = arith.constant 0 : index
    %246 = vector.load %arg5[%c0_102, %c0_103] : memref<64x16xf32, #tpu.memory_space<vmem>>, vector<64x16xf32>
    %cst_104 = arith.constant dense<0.000000e+00> : vector<64x64xf32>
    %247 = tpu.matmul %246, %84, %cst_104 {dimension_numbers = #tpu.dot_dimension_numbers<[1], [0], [0], [1], [0, 0, 1, 1], [], []>} : vector<64x16xf32>, vector<16x64xf32>, vector<64x64xf32> -> vector<64x64xf32>
    %248 = vector.broadcast %86 : vector<1x64xf32> to vector<64x64xf32>
    %249 = arith.addf %247, %248 : vector<64x64xf32>
    %cst_105 = arith.constant 0.000000e+00 : f32
    %250 = vector.broadcast %cst_105 : f32 to vector<8x16xf32>
    %cst_106 = arith.constant 0.000000e+00 : f32
    %251 = vector.broadcast %cst_106 : f32 to vector<8x16xf32>
    %252 = vector.extract_strided_slice %249 {offsets = [0, 0], sizes = [8, 64], strides = [1, 1]} : vector<64x64xf32> to vector<8x64xf32>
    %cst_107 = arith.constant dense<0.000000e+00> : vector<8x64xf32>
    %253 = tpu.matmul %250, %85, %cst_107 {dimension_numbers = #tpu.dot_dimension_numbers<[1], [0], [0], [1], [0, 0, 1, 1], [], []>} : vector<8x16xf32>, vector<16x64xf32>, vector<8x64xf32> -> vector<8x64xf32>
    %254 = arith.addf %252, %253 : vector<8x64xf32>
    %255 = arith.negf %254 : vector<8x64xf32>
    %256 = math.exp %255 : vector<8x64xf32>
    %cst_108 = arith.constant 1.000000e+00 : f32
    %257 = vector.broadcast %cst_108 : f32 to vector<8x64xf32>
    %258 = arith.addf %257, %256 : vector<8x64xf32>
    %259 = arith.divf %257, %258 : vector<8x64xf32>
    %260 = vector.extract_strided_slice %254 {offsets = [0, 32], sizes = [8, 16], strides = [1, 1]} : vector<8x64xf32> to vector<8x16xf32>
    %261 = math.tanh %260 : vector<8x16xf32>
    %262 = vector.extract_strided_slice %259 {offsets = [0, 16], sizes = [8, 16], strides = [1, 1]} : vector<8x64xf32> to vector<8x16xf32>
    %263 = arith.mulf %262, %251 : vector<8x16xf32>
    %264 = vector.extract_strided_slice %259 {offsets = [0, 0], sizes = [8, 16], strides = [1, 1]} : vector<8x64xf32> to vector<8x16xf32>
    %265 = arith.mulf %264, %261 : vector<8x16xf32>
    %266 = arith.addf %263, %265 : vector<8x16xf32>
    %267 = vector.extract_strided_slice %259 {offsets = [0, 48], sizes = [8, 16], strides = [1, 1]} : vector<8x64xf32> to vector<8x16xf32>
    %268 = math.tanh %266 : vector<8x16xf32>
    %269 = arith.mulf %267, %268 : vector<8x16xf32>
    %270 = vector.extract_strided_slice %269 {offsets = [0, 0], sizes = [1, 16], strides = [1, 1]} : vector<8x16xf32> to vector<1x16xf32>
    %271 = vector.shape_cast %270 : vector<1x16xf32> to vector<16xf32>
    %c0_109 = arith.constant 0 : index
    %c0_110 = arith.constant 0 : index
    %272 = vector.load %arg6[%c0_109, %c0_110] : memref<16x16xf32, #tpu.memory_space<vmem>>, vector<1x16xf32>
    %273 = vector.shape_cast %272 : vector<1x16xf32> to vector<16xf32>
    %274 = vector.shape_cast %271 : vector<16xf32> to vector<1x16xf32>
    tpu.vector_store %arg6[%c0_109, %c0_110], %274 {strides = array<i32>} : memref<16x16xf32, #tpu.memory_space<vmem>>, vector<1x16xf32>,
    %275 = vector.extract_strided_slice %269 {offsets = [1, 0], sizes = [1, 16], strides = [1, 1]} : vector<8x16xf32> to vector<1x16xf32>
    %276 = vector.shape_cast %275 : vector<1x16xf32> to vector<16xf32>
    %c8_111 = arith.constant 8 : index
    %c0_112 = arith.constant 0 : index
    %277 = vector.load %arg6[%c8_111, %c0_112] : memref<16x16xf32, #tpu.memory_space<vmem>>, vector<1x16xf32>
    %278 = vector.shape_cast %277 : vector<1x16xf32> to vector<16xf32>
    %279 = vector.shape_cast %276 : vector<16xf32> to vector<1x16xf32>
    tpu.vector_store %arg6[%c8_111, %c0_112], %279 {strides = array<i32>} : memref<16x16xf32, #tpu.memory_space<vmem>>, vector<1x16xf32>,
    %280 = vector.extract_strided_slice %249 {offsets = [8, 0], sizes = [8, 64], strides = [1, 1]} : vector<64x64xf32> to vector<8x64xf32>
    %cst_113 = arith.constant dense<0.000000e+00> : vector<8x64xf32>
    %281 = tpu.matmul %269, %85, %cst_113 {dimension_numbers = #tpu.dot_dimension_numbers<[1], [0], [0], [1], [0, 0, 1, 1], [], []>} : vector<8x16xf32>, vector<16x64xf32>, vector<8x64xf32> -> vector<8x64xf32>
    %282 = arith.addf %280, %281 : vector<8x64xf32>
    %283 = arith.negf %282 : vector<8x64xf32>
    %284 = math.exp %283 : vector<8x64xf32>
    %cst_114 = arith.constant 1.000000e+00 : f32
    %285 = vector.broadcast %cst_114 : f32 to vector<8x64xf32>
    %286 = arith.addf %285, %284 : vector<8x64xf32>
    %287 = arith.divf %285, %286 : vector<8x64xf32>
    %288 = vector.extract_strided_slice %282 {offsets = [0, 32], sizes = [8, 16], strides = [1, 1]} : vector<8x64xf32> to vector<8x16xf32>
    %289 = math.tanh %288 : vector<8x16xf32>
    %290 = vector.extract_strided_slice %287 {offsets = [0, 16], sizes = [8, 16], strides = [1, 1]} : vector<8x64xf32> to vector<8x16xf32>
    %291 = arith.mulf %290, %266 : vector<8x16xf32>
    %292 = vector.extract_strided_slice %287 {offsets = [0, 0], sizes = [8, 16], strides = [1, 1]} : vector<8x64xf32> to vector<8x16xf32>
    %293 = arith.mulf %292, %289 : vector<8x16xf32>
    %294 = arith.addf %291, %293 : vector<8x16xf32>
    %295 = vector.extract_strided_slice %287 {offsets = [0, 48], sizes = [8, 16], strides = [1, 1]} : vector<8x64xf32> to vector<8x16xf32>
    %296 = math.tanh %294 : vector<8x16xf32>
    %297 = arith.mulf %295, %296 : vector<8x16xf32>
    %298 = vector.extract_strided_slice %297 {offsets = [0, 0], sizes = [1, 16], strides = [1, 1]} : vector<8x16xf32> to vector<1x16xf32>
    %299 = vector.shape_cast %298 : vector<1x16xf32> to vector<16xf32>
    %c1_115 = arith.constant 1 : index
    %c0_116 = arith.constant 0 : index
    %300 = vector.load %arg6[%c1_115, %c0_116] : memref<16x16xf32, #tpu.memory_space<vmem>>, vector<1x16xf32>
    %301 = vector.shape_cast %300 : vector<1x16xf32> to vector<16xf32>
    %302 = vector.shape_cast %299 : vector<16xf32> to vector<1x16xf32>
    tpu.vector_store %arg6[%c1_115, %c0_116], %302 {strides = array<i32>} : memref<16x16xf32, #tpu.memory_space<vmem>>, vector<1x16xf32>,
    %303 = vector.extract_strided_slice %297 {offsets = [1, 0], sizes = [1, 16], strides = [1, 1]} : vector<8x16xf32> to vector<1x16xf32>
    %304 = vector.shape_cast %303 : vector<1x16xf32> to vector<16xf32>
    %c9_117 = arith.constant 9 : index
    %c0_118 = arith.constant 0 : index
    %305 = vector.load %arg6[%c9_117, %c0_118] : memref<16x16xf32, #tpu.memory_space<vmem>>, vector<1x16xf32>
    %306 = vector.shape_cast %305 : vector<1x16xf32> to vector<16xf32>
    %307 = vector.shape_cast %304 : vector<16xf32> to vector<1x16xf32>
    tpu.vector_store %arg6[%c9_117, %c0_118], %307 {strides = array<i32>} : memref<16x16xf32, #tpu.memory_space<vmem>>, vector<1x16xf32>,
    %308 = vector.extract_strided_slice %249 {offsets = [16, 0], sizes = [8, 64], strides = [1, 1]} : vector<64x64xf32> to vector<8x64xf32>
    %cst_119 = arith.constant dense<0.000000e+00> : vector<8x64xf32>
    %309 = tpu.matmul %297, %85, %cst_119 {dimension_numbers = #tpu.dot_dimension_numbers<[1], [0], [0], [1], [0, 0, 1, 1], [], []>} : vector<8x16xf32>, vector<16x64xf32>, vector<8x64xf32> -> vector<8x64xf32>
    %310 = arith.addf %308, %309 : vector<8x64xf32>
    %311 = arith.negf %310 : vector<8x64xf32>
    %312 = math.exp %311 : vector<8x64xf32>
    %cst_120 = arith.constant 1.000000e+00 : f32
    %313 = vector.broadcast %cst_120 : f32 to vector<8x64xf32>
    %314 = arith.addf %313, %312 : vector<8x64xf32>
    %315 = arith.divf %313, %314 : vector<8x64xf32>
    %316 = vector.extract_strided_slice %310 {offsets = [0, 32], sizes = [8, 16], strides = [1, 1]} : vector<8x64xf32> to vector<8x16xf32>
    %317 = math.tanh %316 : vector<8x16xf32>
    %318 = vector.extract_strided_slice %315 {offsets = [0, 16], sizes = [8, 16], strides = [1, 1]} : vector<8x64xf32> to vector<8x16xf32>
    %319 = arith.mulf %318, %294 : vector<8x16xf32>
    %320 = vector.extract_strided_slice %315 {offsets = [0, 0], sizes = [8, 16], strides = [1, 1]} : vector<8x64xf32> to vector<8x16xf32>
    %321 = arith.mulf %320, %317 : vector<8x16xf32>
    %322 = arith.addf %319, %321 : vector<8x16xf32>
    %323 = vector.extract_strided_slice %315 {offsets = [0, 48], sizes = [8, 16], strides = [1, 1]} : vector<8x64xf32> to vector<8x16xf32>
    %324 = math.tanh %322 : vector<8x16xf32>
    %325 = arith.mulf %323, %324 : vector<8x16xf32>
    %326 = vector.extract_strided_slice %325 {offsets = [0, 0], sizes = [1, 16], strides = [1, 1]} : vector<8x16xf32> to vector<1x16xf32>
    %327 = vector.shape_cast %326 : vector<1x16xf32> to vector<16xf32>
    %c2_121 = arith.constant 2 : index
    %c0_122 = arith.constant 0 : index
    %328 = vector.load %arg6[%c2_121, %c0_122] : memref<16x16xf32, #tpu.memory_space<vmem>>, vector<1x16xf32>
    %329 = vector.shape_cast %328 : vector<1x16xf32> to vector<16xf32>
    %330 = vector.shape_cast %327 : vector<16xf32> to vector<1x16xf32>
    tpu.vector_store %arg6[%c2_121, %c0_122], %330 {strides = array<i32>} : memref<16x16xf32, #tpu.memory_space<vmem>>, vector<1x16xf32>,
    %331 = vector.extract_strided_slice %325 {offsets = [1, 0], sizes = [1, 16], strides = [1, 1]} : vector<8x16xf32> to vector<1x16xf32>
    %332 = vector.shape_cast %331 : vector<1x16xf32> to vector<16xf32>
    %c10_123 = arith.constant 10 : index
    %c0_124 = arith.constant 0 : index
    %333 = vector.load %arg6[%c10_123, %c0_124] : memref<16x16xf32, #tpu.memory_space<vmem>>, vector<1x16xf32>
    %334 = vector.shape_cast %333 : vector<1x16xf32> to vector<16xf32>
    %335 = vector.shape_cast %332 : vector<16xf32> to vector<1x16xf32>
    tpu.vector_store %arg6[%c10_123, %c0_124], %335 {strides = array<i32>} : memref<16x16xf32, #tpu.memory_space<vmem>>, vector<1x16xf32>,
    %336 = vector.extract_strided_slice %249 {offsets = [24, 0], sizes = [8, 64], strides = [1, 1]} : vector<64x64xf32> to vector<8x64xf32>
    %cst_125 = arith.constant dense<0.000000e+00> : vector<8x64xf32>
    %337 = tpu.matmul %325, %85, %cst_125 {dimension_numbers = #tpu.dot_dimension_numbers<[1], [0], [0], [1], [0, 0, 1, 1], [], []>} : vector<8x16xf32>, vector<16x64xf32>, vector<8x64xf32> -> vector<8x64xf32>
    %338 = arith.addf %336, %337 : vector<8x64xf32>
    %339 = arith.negf %338 : vector<8x64xf32>
    %340 = math.exp %339 : vector<8x64xf32>
    %cst_126 = arith.constant 1.000000e+00 : f32
    %341 = vector.broadcast %cst_126 : f32 to vector<8x64xf32>
    %342 = arith.addf %341, %340 : vector<8x64xf32>
    %343 = arith.divf %341, %342 : vector<8x64xf32>
    %344 = vector.extract_strided_slice %338 {offsets = [0, 32], sizes = [8, 16], strides = [1, 1]} : vector<8x64xf32> to vector<8x16xf32>
    %345 = math.tanh %344 : vector<8x16xf32>
    %346 = vector.extract_strided_slice %343 {offsets = [0, 16], sizes = [8, 16], strides = [1, 1]} : vector<8x64xf32> to vector<8x16xf32>
    %347 = arith.mulf %346, %322 : vector<8x16xf32>
    %348 = vector.extract_strided_slice %343 {offsets = [0, 0], sizes = [8, 16], strides = [1, 1]} : vector<8x64xf32> to vector<8x16xf32>
    %349 = arith.mulf %348, %345 : vector<8x16xf32>
    %350 = arith.addf %347, %349 : vector<8x16xf32>
    %351 = vector.extract_strided_slice %343 {offsets = [0, 48], sizes = [8, 16], strides = [1, 1]} : vector<8x64xf32> to vector<8x16xf32>
    %352 = math.tanh %350 : vector<8x16xf32>
    %353 = arith.mulf %351, %352 : vector<8x16xf32>
    %354 = vector.extract_strided_slice %353 {offsets = [0, 0], sizes = [1, 16], strides = [1, 1]} : vector<8x16xf32> to vector<1x16xf32>
    %355 = vector.shape_cast %354 : vector<1x16xf32> to vector<16xf32>
    %c3_127 = arith.constant 3 : index
    %c0_128 = arith.constant 0 : index
    %356 = vector.load %arg6[%c3_127, %c0_128] : memref<16x16xf32, #tpu.memory_space<vmem>>, vector<1x16xf32>
    %357 = vector.shape_cast %356 : vector<1x16xf32> to vector<16xf32>
    %358 = vector.shape_cast %355 : vector<16xf32> to vector<1x16xf32>
    tpu.vector_store %arg6[%c3_127, %c0_128], %358 {strides = array<i32>} : memref<16x16xf32, #tpu.memory_space<vmem>>, vector<1x16xf32>,
    %359 = vector.extract_strided_slice %353 {offsets = [1, 0], sizes = [1, 16], strides = [1, 1]} : vector<8x16xf32> to vector<1x16xf32>
    %360 = vector.shape_cast %359 : vector<1x16xf32> to vector<16xf32>
    %c11_129 = arith.constant 11 : index
    %c0_130 = arith.constant 0 : index
    %361 = vector.load %arg6[%c11_129, %c0_130] : memref<16x16xf32, #tpu.memory_space<vmem>>, vector<1x16xf32>
    %362 = vector.shape_cast %361 : vector<1x16xf32> to vector<16xf32>
    %363 = vector.shape_cast %360 : vector<16xf32> to vector<1x16xf32>
    tpu.vector_store %arg6[%c11_129, %c0_130], %363 {strides = array<i32>} : memref<16x16xf32, #tpu.memory_space<vmem>>, vector<1x16xf32>,
    %364 = vector.extract_strided_slice %249 {offsets = [32, 0], sizes = [8, 64], strides = [1, 1]} : vector<64x64xf32> to vector<8x64xf32>
    %cst_131 = arith.constant dense<0.000000e+00> : vector<8x64xf32>
    %365 = tpu.matmul %353, %85, %cst_131 {dimension_numbers = #tpu.dot_dimension_numbers<[1], [0], [0], [1], [0, 0, 1, 1], [], []>} : vector<8x16xf32>, vector<16x64xf32>, vector<8x64xf32> -> vector<8x64xf32>
    %366 = arith.addf %364, %365 : vector<8x64xf32>
    %367 = arith.negf %366 : vector<8x64xf32>
    %368 = math.exp %367 : vector<8x64xf32>
    %cst_132 = arith.constant 1.000000e+00 : f32
    %369 = vector.broadcast %cst_132 : f32 to vector<8x64xf32>
    %370 = arith.addf %369, %368 : vector<8x64xf32>
    %371 = arith.divf %369, %370 : vector<8x64xf32>
    %372 = vector.extract_strided_slice %366 {offsets = [0, 32], sizes = [8, 16], strides = [1, 1]} : vector<8x64xf32> to vector<8x16xf32>
    %373 = math.tanh %372 : vector<8x16xf32>
    %374 = vector.extract_strided_slice %371 {offsets = [0, 16], sizes = [8, 16], strides = [1, 1]} : vector<8x64xf32> to vector<8x16xf32>
    %375 = arith.mulf %374, %350 : vector<8x16xf32>
    %376 = vector.extract_strided_slice %371 {offsets = [0, 0], sizes = [8, 16], strides = [1, 1]} : vector<8x64xf32> to vector<8x16xf32>
    %377 = arith.mulf %376, %373 : vector<8x16xf32>
    %378 = arith.addf %375, %377 : vector<8x16xf32>
    %379 = vector.extract_strided_slice %371 {offsets = [0, 48], sizes = [8, 16], strides = [1, 1]} : vector<8x64xf32> to vector<8x16xf32>
    %380 = math.tanh %378 : vector<8x16xf32>
    %381 = arith.mulf %379, %380 : vector<8x16xf32>
    %382 = vector.extract_strided_slice %381 {offsets = [0, 0], sizes = [1, 16], strides = [1, 1]} : vector<8x16xf32> to vector<1x16xf32>
    %383 = vector.shape_cast %382 : vector<1x16xf32> to vector<16xf32>
    %c4_133 = arith.constant 4 : index
    %c0_134 = arith.constant 0 : index
    %384 = vector.load %arg6[%c4_133, %c0_134] : memref<16x16xf32, #tpu.memory_space<vmem>>, vector<1x16xf32>
    %385 = vector.shape_cast %384 : vector<1x16xf32> to vector<16xf32>
    %386 = vector.shape_cast %383 : vector<16xf32> to vector<1x16xf32>
    tpu.vector_store %arg6[%c4_133, %c0_134], %386 {strides = array<i32>} : memref<16x16xf32, #tpu.memory_space<vmem>>, vector<1x16xf32>,
    %387 = vector.extract_strided_slice %381 {offsets = [1, 0], sizes = [1, 16], strides = [1, 1]} : vector<8x16xf32> to vector<1x16xf32>
    %388 = vector.shape_cast %387 : vector<1x16xf32> to vector<16xf32>
    %c12_135 = arith.constant 12 : index
    %c0_136 = arith.constant 0 : index
    %389 = vector.load %arg6[%c12_135, %c0_136] : memref<16x16xf32, #tpu.memory_space<vmem>>, vector<1x16xf32>
    %390 = vector.shape_cast %389 : vector<1x16xf32> to vector<16xf32>
    %391 = vector.shape_cast %388 : vector<16xf32> to vector<1x16xf32>
    tpu.vector_store %arg6[%c12_135, %c0_136], %391 {strides = array<i32>} : memref<16x16xf32, #tpu.memory_space<vmem>>, vector<1x16xf32>,
    %392 = vector.extract_strided_slice %249 {offsets = [40, 0], sizes = [8, 64], strides = [1, 1]} : vector<64x64xf32> to vector<8x64xf32>
    %cst_137 = arith.constant dense<0.000000e+00> : vector<8x64xf32>
    %393 = tpu.matmul %381, %85, %cst_137 {dimension_numbers = #tpu.dot_dimension_numbers<[1], [0], [0], [1], [0, 0, 1, 1], [], []>} : vector<8x16xf32>, vector<16x64xf32>, vector<8x64xf32> -> vector<8x64xf32>
    %394 = arith.addf %392, %393 : vector<8x64xf32>
    %395 = arith.negf %394 : vector<8x64xf32>
    %396 = math.exp %395 : vector<8x64xf32>
    %cst_138 = arith.constant 1.000000e+00 : f32
    %397 = vector.broadcast %cst_138 : f32 to vector<8x64xf32>
    %398 = arith.addf %397, %396 : vector<8x64xf32>
    %399 = arith.divf %397, %398 : vector<8x64xf32>
    %400 = vector.extract_strided_slice %394 {offsets = [0, 32], sizes = [8, 16], strides = [1, 1]} : vector<8x64xf32> to vector<8x16xf32>
    %401 = math.tanh %400 : vector<8x16xf32>
    %402 = vector.extract_strided_slice %399 {offsets = [0, 16], sizes = [8, 16], strides = [1, 1]} : vector<8x64xf32> to vector<8x16xf32>
    %403 = arith.mulf %402, %378 : vector<8x16xf32>
    %404 = vector.extract_strided_slice %399 {offsets = [0, 0], sizes = [8, 16], strides = [1, 1]} : vector<8x64xf32> to vector<8x16xf32>
    %405 = arith.mulf %404, %401 : vector<8x16xf32>
    %406 = arith.addf %403, %405 : vector<8x16xf32>
    %407 = vector.extract_strided_slice %399 {offsets = [0, 48], sizes = [8, 16], strides = [1, 1]} : vector<8x64xf32> to vector<8x16xf32>
    %408 = math.tanh %406 : vector<8x16xf32>
    %409 = arith.mulf %407, %408 : vector<8x16xf32>
    %410 = vector.extract_strided_slice %409 {offsets = [0, 0], sizes = [1, 16], strides = [1, 1]} : vector<8x16xf32> to vector<1x16xf32>
    %411 = vector.shape_cast %410 : vector<1x16xf32> to vector<16xf32>
    %c5_139 = arith.constant 5 : index
    %c0_140 = arith.constant 0 : index
    %412 = vector.load %arg6[%c5_139, %c0_140] : memref<16x16xf32, #tpu.memory_space<vmem>>, vector<1x16xf32>
    %413 = vector.shape_cast %412 : vector<1x16xf32> to vector<16xf32>
    %414 = vector.shape_cast %411 : vector<16xf32> to vector<1x16xf32>
    tpu.vector_store %arg6[%c5_139, %c0_140], %414 {strides = array<i32>} : memref<16x16xf32, #tpu.memory_space<vmem>>, vector<1x16xf32>,
    %415 = vector.extract_strided_slice %409 {offsets = [1, 0], sizes = [1, 16], strides = [1, 1]} : vector<8x16xf32> to vector<1x16xf32>
    %416 = vector.shape_cast %415 : vector<1x16xf32> to vector<16xf32>
    %c13_141 = arith.constant 13 : index
    %c0_142 = arith.constant 0 : index
    %417 = vector.load %arg6[%c13_141, %c0_142] : memref<16x16xf32, #tpu.memory_space<vmem>>, vector<1x16xf32>
    %418 = vector.shape_cast %417 : vector<1x16xf32> to vector<16xf32>
    %419 = vector.shape_cast %416 : vector<16xf32> to vector<1x16xf32>
    tpu.vector_store %arg6[%c13_141, %c0_142], %419 {strides = array<i32>} : memref<16x16xf32, #tpu.memory_space<vmem>>, vector<1x16xf32>,
    %420 = vector.extract_strided_slice %249 {offsets = [48, 0], sizes = [8, 64], strides = [1, 1]} : vector<64x64xf32> to vector<8x64xf32>
    %cst_143 = arith.constant dense<0.000000e+00> : vector<8x64xf32>
    %421 = tpu.matmul %409, %85, %cst_143 {dimension_numbers = #tpu.dot_dimension_numbers<[1], [0], [0], [1], [0, 0, 1, 1], [], []>} : vector<8x16xf32>, vector<16x64xf32>, vector<8x64xf32> -> vector<8x64xf32>
    %422 = arith.addf %420, %421 : vector<8x64xf32>
    %423 = arith.negf %422 : vector<8x64xf32>
    %424 = math.exp %423 : vector<8x64xf32>
    %cst_144 = arith.constant 1.000000e+00 : f32
    %425 = vector.broadcast %cst_144 : f32 to vector<8x64xf32>
    %426 = arith.addf %425, %424 : vector<8x64xf32>
    %427 = arith.divf %425, %426 : vector<8x64xf32>
    %428 = vector.extract_strided_slice %422 {offsets = [0, 32], sizes = [8, 16], strides = [1, 1]} : vector<8x64xf32> to vector<8x16xf32>
    %429 = math.tanh %428 : vector<8x16xf32>
    %430 = vector.extract_strided_slice %427 {offsets = [0, 16], sizes = [8, 16], strides = [1, 1]} : vector<8x64xf32> to vector<8x16xf32>
    %431 = arith.mulf %430, %406 : vector<8x16xf32>
    %432 = vector.extract_strided_slice %427 {offsets = [0, 0], sizes = [8, 16], strides = [1, 1]} : vector<8x64xf32> to vector<8x16xf32>
    %433 = arith.mulf %432, %429 : vector<8x16xf32>
    %434 = arith.addf %431, %433 : vector<8x16xf32>
    %435 = vector.extract_strided_slice %427 {offsets = [0, 48], sizes = [8, 16], strides = [1, 1]} : vector<8x64xf32> to vector<8x16xf32>
    %436 = math.tanh %434 : vector<8x16xf32>
    %437 = arith.mulf %435, %436 : vector<8x16xf32>
    %438 = vector.extract_strided_slice %437 {offsets = [0, 0], sizes = [1, 16], strides = [1, 1]} : vector<8x16xf32> to vector<1x16xf32>
    %439 = vector.shape_cast %438 : vector<1x16xf32> to vector<16xf32>
    %c6_145 = arith.constant 6 : index
    %c0_146 = arith.constant 0 : index
    %440 = vector.load %arg6[%c6_145, %c0_146] : memref<16x16xf32, #tpu.memory_space<vmem>>, vector<1x16xf32>
    %441 = vector.shape_cast %440 : vector<1x16xf32> to vector<16xf32>
    %442 = vector.shape_cast %439 : vector<16xf32> to vector<1x16xf32>
    tpu.vector_store %arg6[%c6_145, %c0_146], %442 {strides = array<i32>} : memref<16x16xf32, #tpu.memory_space<vmem>>, vector<1x16xf32>,
    %443 = vector.extract_strided_slice %437 {offsets = [1, 0], sizes = [1, 16], strides = [1, 1]} : vector<8x16xf32> to vector<1x16xf32>
    %444 = vector.shape_cast %443 : vector<1x16xf32> to vector<16xf32>
    %c14_147 = arith.constant 14 : index
    %c0_148 = arith.constant 0 : index
    %445 = vector.load %arg6[%c14_147, %c0_148] : memref<16x16xf32, #tpu.memory_space<vmem>>, vector<1x16xf32>
    %446 = vector.shape_cast %445 : vector<1x16xf32> to vector<16xf32>
    %447 = vector.shape_cast %444 : vector<16xf32> to vector<1x16xf32>
    tpu.vector_store %arg6[%c14_147, %c0_148], %447 {strides = array<i32>} : memref<16x16xf32, #tpu.memory_space<vmem>>, vector<1x16xf32>,
    %448 = vector.extract_strided_slice %249 {offsets = [56, 0], sizes = [8, 64], strides = [1, 1]} : vector<64x64xf32> to vector<8x64xf32>
    %cst_149 = arith.constant dense<0.000000e+00> : vector<8x64xf32>
    %449 = tpu.matmul %437, %85, %cst_149 {dimension_numbers = #tpu.dot_dimension_numbers<[1], [0], [0], [1], [0, 0, 1, 1], [], []>} : vector<8x16xf32>, vector<16x64xf32>, vector<8x64xf32> -> vector<8x64xf32>
    %450 = arith.addf %448, %449 : vector<8x64xf32>
    %451 = arith.negf %450 : vector<8x64xf32>
    %452 = math.exp %451 : vector<8x64xf32>
    %cst_150 = arith.constant 1.000000e+00 : f32
    %453 = vector.broadcast %cst_150 : f32 to vector<8x64xf32>
    %454 = arith.addf %453, %452 : vector<8x64xf32>
    %455 = arith.divf %453, %454 : vector<8x64xf32>
    %456 = vector.extract_strided_slice %450 {offsets = [0, 32], sizes = [8, 16], strides = [1, 1]} : vector<8x64xf32> to vector<8x16xf32>
    %457 = math.tanh %456 : vector<8x16xf32>
    %458 = vector.extract_strided_slice %455 {offsets = [0, 16], sizes = [8, 16], strides = [1, 1]} : vector<8x64xf32> to vector<8x16xf32>
    %459 = arith.mulf %458, %434 : vector<8x16xf32>
    %460 = vector.extract_strided_slice %455 {offsets = [0, 0], sizes = [8, 16], strides = [1, 1]} : vector<8x64xf32> to vector<8x16xf32>
    %461 = arith.mulf %460, %457 : vector<8x16xf32>
    %462 = arith.addf %459, %461 : vector<8x16xf32>
    %463 = vector.extract_strided_slice %455 {offsets = [0, 48], sizes = [8, 16], strides = [1, 1]} : vector<8x64xf32> to vector<8x16xf32>
    %464 = math.tanh %462 : vector<8x16xf32>
    %465 = arith.mulf %463, %464 : vector<8x16xf32>
    %466 = vector.extract_strided_slice %465 {offsets = [0, 0], sizes = [1, 16], strides = [1, 1]} : vector<8x16xf32> to vector<1x16xf32>
    %467 = vector.shape_cast %466 : vector<1x16xf32> to vector<16xf32>
    %c7_151 = arith.constant 7 : index
    %c0_152 = arith.constant 0 : index
    %468 = vector.load %arg6[%c7_151, %c0_152] : memref<16x16xf32, #tpu.memory_space<vmem>>, vector<1x16xf32>
    %469 = vector.shape_cast %468 : vector<1x16xf32> to vector<16xf32>
    %470 = vector.shape_cast %467 : vector<16xf32> to vector<1x16xf32>
    tpu.vector_store %arg6[%c7_151, %c0_152], %470 {strides = array<i32>} : memref<16x16xf32, #tpu.memory_space<vmem>>, vector<1x16xf32>,
    %471 = vector.extract_strided_slice %465 {offsets = [1, 0], sizes = [1, 16], strides = [1, 1]} : vector<8x16xf32> to vector<1x16xf32>
    %472 = vector.shape_cast %471 : vector<1x16xf32> to vector<16xf32>
    %c15_153 = arith.constant 15 : index
    %c0_154 = arith.constant 0 : index
    %473 = vector.load %arg6[%c15_153, %c0_154] : memref<16x16xf32, #tpu.memory_space<vmem>>, vector<1x16xf32>
    %474 = vector.shape_cast %473 : vector<1x16xf32> to vector<16xf32>
    %475 = vector.shape_cast %472 : vector<16xf32> to vector<1x16xf32>
    tpu.vector_store %arg6[%c15_153, %c0_154], %475 {strides = array<i32>} : memref<16x16xf32, #tpu.memory_space<vmem>>, vector<1x16xf32>,
    %c0_155 = arith.constant 0 : index
    %c0_156 = arith.constant 0 : index
    %476 = vector.load %arg6[%c0_155, %c0_156] : memref<16x16xf32, #tpu.memory_space<vmem>>, vector<16x16xf32>
    %cst_157 = arith.constant dense<0.000000e+00> : vector<16x128xf32>
    %477 = tpu.matmul %476, %87, %cst_157 {dimension_numbers = #tpu.dot_dimension_numbers<[1], [0], [0], [1], [0, 0, 1, 1], [], []>} : vector<16x16xf32>, vector<16x128xf32>, vector<16x128xf32> -> vector<16x128xf32>
    %478 = vector.broadcast %88 : vector<1x128xf32> to vector<16x128xf32>
    %479 = arith.addf %477, %478 : vector<16x128xf32>
    %c0_158 = arith.constant 0 : index
    %c0_159 = arith.constant 0 : index
    %480 = vector.load %arg3[%c0_158, %c0_159] : memref<16x128xf32, #tpu.memory_space<vmem>>, vector<16x128xf32>
    tpu.vector_store %arg3[%c0_158, %c0_159], %479 {strides = array<i32>} : memref<16x128xf32, #tpu.memory_space<vmem>>, vector<16x128xf32>,
    return
  }
}

</mosaic_0001>

<llo_original>
// kernel: simple_lstm_forward.1
$region0: #{simple_lstm_forward.1}
  #allocation0 [shape = 'u32[]', space=smem, size = 0x4, offset = 0x4, fixed_abs, tag = 'smem constant byte address 0x4 - core index']
  #allocation1 [shape = 'u32[144,128]{1,0:T(1,128)}', space=vmem, size = 0x12000, scoped, tag = 'internal scratch']
  #allocation2 [shape = 'f32[64,128]{1,0:T(8,128)}', space=vmem, size = 0x8000, scoped, tag = 'scratch operand']
  #allocation3 [shape = 'f32[64,16]{1,0:T(8,128)}', space=vmem, size = 0x8000, scoped, tag = 'scratch operand']
  #allocation4 [shape = 'f32[16,16]{1,0:T(8,128)}', space=vmem, size = 0x2000, scoped, tag = 'scratch operand']
  %s0 = inlined_call_operand.vmem [shape: s32[16], index: 0, kind: input, shape index: {}]
  %s1 = inlined_call_operand.hbm [shape: f32[12,1,128], index: 1, kind: input, shape index: {}]
  %s2 = inlined_call_operand.hbm [shape: f32[88,128], index: 2, kind: input, shape index: {}]
  %s3 = inlined_call_operand.hbm [shape: f32[16,128], index: 3, kind: output, shape index: {}]
  %s4 = sld [smem:[#allocation0]]
  $region34: #{simple_lstm_forward.1} parent=0
    _
  %s6 = ssub.s32 1, %s4
  %s7 = scalar_select 0, %s6, %s4
  $region1: #{simple_lstm_forward.1} parent=0
    #allocation5 [shape = 'u8[512]{0}', space=smem, size = 0x200, scoped, tag = 'input window, operand 0, single buffered']
    #allocation6 [shape = 's32[1]{0}', space=sflag, size = 0x4, scoped, tag = 'scoped memory for simple_lstm_forward.1']
    #allocation7 [shape = 's32[1]{0}', space=sflag, size = 0x4, scoped, tag = 'scoped memory for simple_lstm_forward.1']
    #allocation8 [shape = 's32[1]{0}', space=sflag, size = 0x4, scoped, tag = 'scoped memory for simple_lstm_forward.1']
    #allocation9 [shape = 'u8[6144]{0}', space=vmem, size = 0x1800, scoped, tag = 'input window, operand 1, single buffered']
    #allocation10 [shape = 'u8[45056]{0}', space=vmem, size = 0xb000, scoped, tag = 'input window, operand 2, single buffered']
    #allocation11 [shape = 's32[1]{0}', space=sflag, size = 0x4, scoped, tag = 'scoped memory for simple_lstm_forward.1']
    #allocation12 [shape = 'u8[8192]{0}', space=vmem, size = 0x2000, scoped, tag = 'output window, operand 0, single buffered']
    %8 = vsyncpa [#allocation8], 0
    %9 = vsyncpa [#allocation6], 0
    %10 = vsyncpa [#allocation11], 0
    %11 = vsyncpa [#allocation7], 0
    // Predicated region
    $region2: #{simple_lstm_forward.1} parent=1 // pred_check
      _
    $region3: #{simple_lstm_forward.1} parent=1 // pred_check_branch
      %13 = sbr.rel (0) target = $region5
    $region4: #{simple_lstm_forward.1} parent=1 // pred_region
      %s15 = ssub.s32 16, 16
      %16 = vsyncadd [#allocation8], %s15
      %s18 = sshll.u32 %s0, 4
      %s19 = int_to_ptr.vmem [resolvable:$true] %s18
      %21 = dma.vmem_to_smem %s19, 16, [#allocation5], [#allocation8]
    $region5: #{simple_lstm_forward.1} parent=1 // pred_fallthru
      _
    // Predicated region
    $region6: #{simple_lstm_forward.1} parent=1 // pred_check
      _
    $region7: #{simple_lstm_forward.1} parent=1 // pred_check_branch
      %23 = sbr.rel (0) target = $region9
    $region8: #{simple_lstm_forward.1} parent=1 // pred_region
      %s25 = ssub.s32 192, 192
      %26 = vsyncadd [#allocation6], %s25
      %s27 = sshll.u32 [#allocation9], 4
      %s28 = int_to_ptr.vmem [resolvable:$true] %s27
      %33 = dma.hbm_to_vmem [thread:$0]  %s1, 192, %s28, [#allocation6], 16, 16, 1
    $region9: #{simple_lstm_forward.1} parent=1 // pred_fallthru
      _
    // Predicated region
    $region10: #{simple_lstm_forward.1} parent=1 // pred_check
      _
    $region11: #{simple_lstm_forward.1} parent=1 // pred_check_branch
      %35 = sbr.rel (0) target = $region13
    $region12: #{simple_lstm_forward.1} parent=1 // pred_region
      %s37 = ssub.s32 1408, 1408
      %38 = vsyncadd [#allocation11], %s37
      %s39 = sshll.u32 [#allocation10], 4
      %s40 = int_to_ptr.vmem [resolvable:$true] %s39
      %45 = dma.hbm_to_vmem [thread:$0]  %s2, 1408, %s40, [#allocation11], 128, 128, 8
    $region13: #{simple_lstm_forward.1} parent=1 // pred_fallthru
      _
    // Predicated region
    $region14: #{simple_lstm_forward.1} parent=1 // pred_check
      _
    $region15: #{simple_lstm_forward.1} parent=1 // pred_check_branch
      %47 = sbr.rel (0) target = $region17
    $region16: #{simple_lstm_forward.1} parent=1 // pred_region
      %48 = dma.done [#allocation8], 16
    $region17: #{simple_lstm_forward.1} parent=1 // pred_fallthru
      _
    // Predicated region
    $region18: #{simple_lstm_forward.1} parent=1 // pred_check
      _
    $region19: #{simple_lstm_forward.1} parent=1 // pred_check_branch
      %50 = sbr.rel (0) target = $region21
    $region20: #{simple_lstm_forward.1} parent=1 // pred_region
      %51 = dma.done [#allocation6], 192
    $region21: #{simple_lstm_forward.1} parent=1 // pred_fallthru
      _
    // Predicated region
    $region22: #{simple_lstm_forward.1} parent=1 // pred_check
      _
    $region23: #{simple_lstm_forward.1} parent=1 // pred_check_branch
      %53 = sbr.rel (0) target = $region25
    $region24: #{simple_lstm_forward.1} parent=1 // pred_region
      %54 = dma.done [#allocation11], 1408
    $region25: #{simple_lstm_forward.1} parent=1 // pred_fallthru
      _
    %55 = sfence
    %56 = vst [vmem:[#allocation2] sm:$0xff] 0.0
    %57 = vst [vmem:[#allocation2 + $0x8] sm:$0xff] 0.0
    %58 = vst [vmem:[#allocation2 + $0x10] sm:$0xff] 0.0
    %59 = vst [vmem:[#allocation2 + $0x18] sm:$0xff] 0.0
    %60 = vst [vmem:[#allocation2 + $0x20] sm:$0xff] 0.0
    %61 = vst [vmem:[#allocation2 + $0x28] sm:$0xff] 0.0
    %62 = vst [vmem:[#allocation2 + $0x30] sm:$0xff] 0.0
    %63 = vst [vmem:[#allocation2 + $0x38] sm:$0xff] 0.0
    %s64 = sld [smem:[#allocation5]]
    %s65 = scalar_lea.vmem [#allocation9], %s64
    %v66 = vld [vmem:[%s65] sm:$0x1]
    %67 = vst [vmem:[#allocation2] sm:$0x1] %v66
    %s68 = sld [smem:[#allocation5 + $0x8]]
    %s69 = scalar_lea.vmem [#allocation9], %s68
    %v70 = vld [vmem:[%s69] sm:$0x1]
    %71 = vst [vmem:[#allocation2 + $0x1] sm:$0x1] %v70
    %s72 = sld [smem:[#allocation5 + $0x1]]
    %s73 = scalar_lea.vmem [#allocation9], %s72
    %v74 = vld [vmem:[%s73] sm:$0x1]
    %75 = vst [vmem:[#allocation2 + $0x8] sm:$0x1] %v74
    %s76 = sld [smem:[#allocation5 + $0x9]]
    %s77 = scalar_lea.vmem [#allocation9], %s76
    %v78 = vld [vmem:[%s77] sm:$0x1]
    %79 = vst [vmem:[#allocation2 + $0x9] sm:$0x1] %v78
    %s80 = sld [smem:[#allocation5 + $0x2]]
    %s81 = scalar_lea.vmem [#allocation9], %s80
    %v82 = vld [vmem:[%s81] sm:$0x1]
    %83 = vst [vmem:[#allocation2 + $0x10] sm:$0x1] %v82
    %s84 = sld [smem:[#allocation5 + $0xa]]
    %s85 = scalar_lea.vmem [#allocation9], %s84
    %v86 = vld [vmem:[%s85] sm:$0x1]
    %87 = vst [vmem:[#allocation2 + $0x11] sm:$0x1] %v86
    %s88 = sld [smem:[#allocation5 + $0x3]]
    %s89 = scalar_lea.vmem [#allocation9], %s88
    %v90 = vld [vmem:[%s89] sm:$0x1]
    %91 = vst [vmem:[#allocation2 + $0x18] sm:$0x1] %v90
    %s92 = sld [smem:[#allocation5 + $0xb]]
    %s93 = scalar_lea.vmem [#allocation9], %s92
    %v94 = vld [vmem:[%s93] sm:$0x1]
    %95 = vst [vmem:[#allocation2 + $0x19] sm:$0x1] %v94
    %s96 = sld [smem:[#allocation5 + $0x4]]
    %s97 = scalar_lea.vmem [#allocation9], %s96
    %v98 = vld [vmem:[%s97] sm:$0x1]
    %99 = vst [vmem:[#allocation2 + $0x20] sm:$0x1] %v98
    %s100 = sld [smem:[#allocation5 + $0xc]]
    %s101 = scalar_lea.vmem [#allocation9], %s100
    %v102 = vld [vmem:[%s101] sm:$0x1]
    %103 = vst [vmem:[#allocation2 + $0x21] sm:$0x1] %v102
    %s104 = sld [smem:[#allocation5 + $0x5]]
    %s105 = scalar_lea.vmem [#allocation9], %s104
    %v106 = vld [vmem:[%s105] sm:$0x1]
    %107 = vst [vmem:[#allocation2 + $0x28] sm:$0x1] %v106
    %s108 = sld [smem:[#allocation5 + $0xd]]
    %s109 = scalar_lea.vmem [#allocation9], %s108
    %v110 = vld [vmem:[%s109] sm:$0x1]
    %111 = vst [vmem:[#allocation2 + $0x29] sm:$0x1] %v110
    %s112 = sld [smem:[#allocation5 + $0x6]]
    %s113 = scalar_lea.vmem [#allocation9], %s112
    %v114 = vld [vmem:[%s113] sm:$0x1]
    %115 = vst [vmem:[#allocation2 + $0x30] sm:$0x1] %v114
    %s116 = sld [smem:[#allocation5 + $0xe]]
    %s117 = scalar_lea.vmem [#allocation9], %s116
    %v118 = vld [vmem:[%s117] sm:$0x1]
    %119 = vst [vmem:[#allocation2 + $0x31] sm:$0x1] %v118
    %s120 = sld [smem:[#allocation5 + $0x7]]
    %s121 = scalar_lea.vmem [#allocation9], %s120
    %v122 = vld [vmem:[%s121] sm:$0x1]
    %123 = vst [vmem:[#allocation2 + $0x38] sm:$0x1] %v122
    %s124 = sld [smem:[#allocation5 + $0xf]]
    %s125 = scalar_lea.vmem [#allocation9], %s124
    %v126 = vld [vmem:[%s125] sm:$0x1]
    %127 = vst [vmem:[#allocation2 + $0x39] sm:$0x1] %v126
    %v128 = vld [vmem:[#allocation10] sm:$0xff]
    %v129 = vld [vmem:[#allocation10 + $0x8] sm:$0xff]
    %v130 = vld [vmem:[#allocation10 + $0x10] sm:$0x1]
    %v131 = vld [vmem:[#allocation10 + $0x18] sm:$0xff]
    %v132 = vld [vmem:[#allocation10 + $0x20] sm:$0xff]
    %v133 = vld [vmem:[#allocation10 + $0x28] sm:$0xff]
    %v134 = vld [vmem:[#allocation10 + $0x30] sm:$0xff]
    %v135 = vld [vmem:[#allocation10 + $0x38] sm:$0x1]
    %v136 = vld [vmem:[#allocation10 + $0x40] sm:$0xff]
    %v137 = vld [vmem:[#allocation10 + $0x48] sm:$0xff]
    %v138 = vld [vmem:[#allocation10 + $0x50] sm:$0x1]
    %v139 = vld [vmem:[#allocation2] sm:$0xff]
    %v140 = vld [vmem:[#allocation2 + $0x8] sm:$0xff]
    %v141 = vld [vmem:[#allocation2 + $0x10] sm:$0xff]
    %v142 = vld [vmem:[#allocation2 + $0x18] sm:$0xff]
    %v143 = vld [vmem:[#allocation2 + $0x20] sm:$0xff]
    %v144 = vld [vmem:[#allocation2 + $0x28] sm:$0xff]
    %v145 = vld [vmem:[#allocation2 + $0x30] sm:$0xff]
    %v146 = vld [vmem:[#allocation2 + $0x38] sm:$0xff]
    %v147 = vlaneseq
    %v148 = vshrl.u32 %v147, 7
    %v149 = vsub.s32 0, %v148
    %v150 = vrot.slane %v130, %v149
    %v151 = vadd.f32 %v139, %v150
    %v152 = vadd.f32 %v140, %v150
    %v153 = vadd.f32 %v141, %v150
    %v154 = vadd.f32 %v142, %v150
    %v155 = vadd.f32 %v143, %v150
    %v156 = vadd.f32 %v144, %v150
    %v157 = vadd.f32 %v145, %v150
    %v158 = vadd.f32 %v146, %v150
    %vm159 = vcmask 130048
    %v161 = vsel %vm159, 0.0, 0
    %163 = vmatprep.subr.mxu0 0.0
    %164 = vmatpush1.msra.mxu0 %v128
    %165 = vmatprep.subr.mxu0 0.0
    %166 = vmatpush1.msra.mxu0 %v129
    %167 = vmatprep.subr.mxu0 0.0
    %168 = vmatpush1.msra.mxu0 0.0
    %169 = vmatprep.subr.mxu0 0.0
    %170 = vmatpush1.msra.mxu0 0.0
    %171 = vmatprep.subr.mxu0 0.0
    %172 = vmatpush1.msra.mxu0 0.0
    %173 = vmatprep.subr.mxu0 0.0
    %174 = vmatpush1.msra.mxu0 0.0
    %175 = vmatprep.subr.mxu0 0.0
    %176 = vmatpush1.msra.mxu0 0.0
    %177 = vmatprep.subr.mxu0 0.0
    %178 = vmatpush1.msra.mxu0 0.0
    %179 = vmatprep.subr.mxu0 0.0
    %180 = vmatpush1.msra.mxu0 0.0
    %181 = vmatprep.subr.mxu0 0.0
    %182 = vmatpush1.msra.mxu0 0.0
    %183 = vmatprep.subr.mxu0 0.0
    %184 = vmatpush1.msra.mxu0 0.0
    %185 = vmatprep.subr.mxu0 0.0
    %186 = vmatpush1.msra.mxu0 0.0
    %187 = vmatprep.subr.mxu0 0.0
    %188 = vmatpush1.msra.mxu0 0.0
    %189 = vmatprep.subr.mxu0 0.0
    %190 = vmatpush1.msra.mxu0 0.0
    %191 = vmatprep.subr.mxu0 0.0
    %192 = vmatpush1.msra.mxu0 0.0
    %193 = vmatprep.subr.mxu0 0.0
    %194 = vmatpush1.msra.mxu0 0.0
    %195 = vmatprep.subr.mxu0 0.0
    %196 = vmatpush1.msra.mxu0 0.0
    %197 = vmatprep.subr.mxu0 0.0
    %198 = vmatpush1.msra.mxu0 0.0
    %199 = vmatprep.subr.mxu0 0.0
    %200 = vmatpush1.msra.mxu0 0.0
    %201 = vmatprep.subr.mxu0 0.0
    %202 = vmatpush1.msra.mxu0 0.0
    %203 = vmatprep.subr.mxu0 0.0
    %204 = vmatpush1.msra.mxu0 0.0
    %205 = vmatprep.subr.mxu0 0.0
    %206 = vmatpush1.msra.mxu0 0.0
    %207 = vmatprep.subr.mxu0 0.0
    %208 = vmatpush1.msra.mxu0 0.0
    %209 = vmatprep.subr.mxu0 0.0
    %210 = vmatpush1.msra.mxu0 0.0
    %211 = vmatprep.subr.mxu0 0.0
    %212 = vmatpush1.msra.mxu0 0.0
    %213 = vmatprep.subr.mxu0 0.0
    %214 = vmatpush1.msra.mxu0 0.0
    %215 = vmatprep.subr.mxu0 0.0
    %216 = vmatpush1.msra.mxu0 0.0
    %217 = vmatprep.subr.mxu0 0.0
    %218 = vmatpush1.msra.mxu0 0.0
    %219 = vmatprep.subr.mxu0 0.0
    %220 = vmatpush1.msra.mxu0 0.0
    %221 = vmatprep.subr.mxu0 0.0
    %222 = vmatpush1.msra.mxu0 0.0
    %223 = vmatprep.subr.mxu0 0.0
    %224 = vmatpush1.msra.mxu0 0.0
    %225 = vmatprep.subr.mxu0 0.0
    %226 = vmatpush1.msra.mxu0 0.0
    %227 = vmatprep.mubr.f32.mxu0 0.0
    %228 = vmatmul.mubr.f32.gmra.mrb[0].mxu0 %v161
    %v229 = vpop.f32.mrb[0].mxu0
    %v230 = vadd.f32 0.0, %v229
    %v231 = vpop.f32.mrb[0].mxu0
    %232 = vdwg.mxu0
    %v233 = vadd.f32 %v151, %v230
    %v234 = vxor.u32 %v233, 2147483648
    %v235 = vmul.f32 %v234, 1.442695
    %v236 = vpow.pop %v235
    %v237 = vadd.f32 %v236, 1.0
    %v238 = vrcp.pop %v237
    %v239 = vmul.f32 1.0, %v238
    %v240 = vtanh.pop %v233
    %v241 = vmul.f32 %v239, 0.0
    %243 = vrot.lane.b32.xlu0 %v240, 96
    %v244 = vpop.permute.xlu0 %243
    %v246 = vmul.f32 %v239, %v244
    %248 = vrot.lane.b32.xlu0 %v246, 16
    %v249 = vpop.permute.xlu0 %248
    %v251 = vadd.f32 %v241, %v249
    %v252 = vtanh.pop %v251
    %254 = vrot.lane.b32.xlu0 %v252, 32
    %v255 = vpop.permute.xlu0 %254
    %v257 = vmul.f32 %v239, %v255
    %259 = vrot.lane.b32.xlu0 %v257, 80
    %v260 = vpop.permute.xlu0 %259
    %262 = vst.msk [vmem:[#allocation3] sm:$0xff] %vm159, %v260
    %v263 = vsel %vm159, %v260, 0
    %265 = vmatprep.subr.mxu0 0.0
    %266 = vmatpush1.msra.mxu0 %v128
    %267 = vmatprep.subr.mxu0 0.0
    %268 = vmatpush1.msra.mxu0 %v129
    %269 = vmatprep.subr.mxu0 0.0
    %270 = vmatpush1.msra.mxu0 0.0
    %271 = vmatprep.subr.mxu0 0.0
    %272 = vmatpush1.msra.mxu0 0.0
    %273 = vmatprep.subr.mxu0 0.0
    %274 = vmatpush1.msra.mxu0 0.0
    %275 = vmatprep.subr.mxu0 0.0
    %276 = vmatpush1.msra.mxu0 0.0
    %277 = vmatprep.subr.mxu0 0.0
    %278 = vmatpush1.msra.mxu0 0.0
    %279 = vmatprep.subr.mxu0 0.0
    %280 = vmatpush1.msra.mxu0 0.0
    %281 = vmatprep.subr.mxu0 0.0
    %282 = vmatpush1.msra.mxu0 0.0
    %283 = vmatprep.subr.mxu0 0.0
    %284 = vmatpush1.msra.mxu0 0.0
    %285 = vmatprep.subr.mxu0 0.0
    %286 = vmatpush1.msra.mxu0 0.0
    %287 = vmatprep.subr.mxu0 0.0
    %288 = vmatpush1.msra.mxu0 0.0
    %289 = vmatprep.subr.mxu0 0.0
    %290 = vmatpush1.msra.mxu0 0.0
    %291 = vmatprep.subr.mxu0 0.0
    %292 = vmatpush1.msra.mxu0 0.0
    %293 = vmatprep.subr.mxu0 0.0
    %294 = vmatpush1.msra.mxu0 0.0
    %295 = vmatprep.subr.mxu0 0.0
    %296 = vmatpush1.msra.mxu0 0.0
    %297 = vmatprep.subr.mxu0 0.0
    %298 = vmatpush1.msra.mxu0 0.0
    %299 = vmatprep.subr.mxu0 0.0
    %300 = vmatpush1.msra.mxu0 0.0
    %301 = vmatprep.subr.mxu0 0.0
    %302 = vmatpush1.msra.mxu0 0.0
    %303 = vmatprep.subr.mxu0 0.0
    %304 = vmatpush1.msra.mxu0 0.0
    %305 = vmatprep.subr.mxu0 0.0
    %306 = vmatpush1.msra.mxu0 0.0
    %307 = vmatprep.subr.mxu0 0.0
    %308 = vmatpush1.msra.mxu0 0.0
    %309 = vmatprep.subr.mxu0 0.0
    %310 = vmatpush1.msra.mxu0 0.0
    %311 = vmatprep.subr.mxu0 0.0
    %312 = vmatpush1.msra.mxu0 0.0
    %313 = vmatprep.subr.mxu0 0.0
    %314 = vmatpush1.msra.mxu0 0.0
    %315 = vmatprep.subr.mxu0 0.0
    %316 = vmatpush1.msra.mxu0 0.0
    %317 = vmatprep.subr.mxu0 0.0
    %318 = vmatpush1.msra.mxu0 0.0
    %319 = vmatprep.subr.mxu0 0.0
    %320 = vmatpush1.msra.mxu0 0.0
    %321 = vmatprep.subr.mxu0 0.0
    %322 = vmatpush1.msra.mxu0 0.0
    %323 = vmatprep.subr.mxu0 0.0
    %324 = vmatpush1.msra.mxu0 0.0
    %325 = vmatprep.subr.mxu0 0.0
    %326 = vmatpush1.msra.mxu0 0.0
    %327 = vmatprep.subr.mxu0 0.0
    %328 = vmatpush1.msra.mxu0 0.0
    %329 = vmatprep.mubr.f32.mxu0 0.0
    %330 = vmatmul.mubr.f32.gmra.mrb[0].mxu0 %v263
    %v331 = vpop.f32.mrb[0].mxu0
    %v332 = vadd.f32 0.0, %v331
    %v333 = vpop.f32.mrb[0].mxu0
    %334 = vdwg.mxu0
    %v335 = vadd.f32 %v152, %v332
    %v336 = vxor.u32 %v335, 2147483648
    %v337 = vmul.f32 %v336, 1.442695
    %v338 = vpow.pop %v337
    %v339 = vadd.f32 %v338, 1.0
    %v340 = vrcp.pop %v339
    %v341 = vmul.f32 1.0, %v340
    %v342 = vtanh.pop %v335
    %v343 = vmul.f32 %v341, %v251
    %345 = vrot.lane.b32.xlu0 %v342, 96
    %v346 = vpop.permute.xlu0 %345
    %v348 = vmul.f32 %v341, %v346
    %350 = vrot.lane.b32.xlu0 %v348, 16
    %v351 = vpop.permute.xlu0 %350
    %v353 = vadd.f32 %v343, %v351
    %v354 = vtanh.pop %v353
    %356 = vrot.lane.b32.xlu0 %v354, 32
    %v357 = vpop.permute.xlu0 %356
    %v359 = vmul.f32 %v341, %v357
    %361 = vrot.lane.b32.xlu0 %v359, 80
    %v362 = vpop.permute.xlu0 %361
    %364 = vst.msk [vmem:[#allocation3 + $0x8] sm:$0xff] %vm159, %v362
    %v365 = vsel %vm159, %v362, 0
    %367 = vmatprep.subr.mxu0 0.0
    %368 = vmatpush1.msra.mxu0 %v128
    %369 = vmatprep.subr.mxu0 0.0
    %370 = vmatpush1.msra.mxu0 %v129
    %371 = vmatprep.subr.mxu0 0.0
    %372 = vmatpush1.msra.mxu0 0.0
    %373 = vmatprep.subr.mxu0 0.0
    %374 = vmatpush1.msra.mxu0 0.0
    %375 = vmatprep.subr.mxu0 0.0
    %376 = vmatpush1.msra.mxu0 0.0
    %377 = vmatprep.subr.mxu0 0.0
    %378 = vmatpush1.msra.mxu0 0.0
    %379 = vmatprep.subr.mxu0 0.0
    %380 = vmatpush1.msra.mxu0 0.0
    %381 = vmatprep.subr.mxu0 0.0
    %382 = vmatpush1.msra.mxu0 0.0
    %383 = vmatprep.subr.mxu0 0.0
    %384 = vmatpush1.msra.mxu0 0.0
    %385 = vmatprep.subr.mxu0 0.0
    %386 = vmatpush1.msra.mxu0 0.0
    %387 = vmatprep.subr.mxu0 0.0
    %388 = vmatpush1.msra.mxu0 0.0
    %389 = vmatprep.subr.mxu0 0.0
    %390 = vmatpush1.msra.mxu0 0.0
    %391 = vmatprep.subr.mxu0 0.0
    %392 = vmatpush1.msra.mxu0 0.0
    %393 = vmatprep.subr.mxu0 0.0
    %394 = vmatpush1.msra.mxu0 0.0
    %395 = vmatprep.subr.mxu0 0.0
    %396 = vmatpush1.msra.mxu0 0.0
    %397 = vmatprep.subr.mxu0 0.0
    %398 = vmatpush1.msra.mxu0 0.0
    %399 = vmatprep.subr.mxu0 0.0
    %400 = vmatpush1.msra.mxu0 0.0
    %401 = vmatprep.subr.mxu0 0.0
    %402 = vmatpush1.msra.mxu0 0.0
    %403 = vmatprep.subr.mxu0 0.0
    %404 = vmatpush1.msra.mxu0 0.0
    %405 = vmatprep.subr.mxu0 0.0
    %406 = vmatpush1.msra.mxu0 0.0
    %407 = vmatprep.subr.mxu0 0.0
    %408 = vmatpush1.msra.mxu0 0.0
    %409 = vmatprep.subr.mxu0 0.0
    %410 = vmatpush1.msra.mxu0 0.0
    %411 = vmatprep.subr.mxu0 0.0
    %412 = vmatpush1.msra.mxu0 0.0
    %413 = vmatprep.subr.mxu0 0.0
    %414 = vmatpush1.msra.mxu0 0.0
    %415 = vmatprep.subr.mxu0 0.0
    %416 = vmatpush1.msra.mxu0 0.0
    %417 = vmatprep.subr.mxu0 0.0
    %418 = vmatpush1.msra.mxu0 0.0
    %419 = vmatprep.subr.mxu0 0.0
    %420 = vmatpush1.msra.mxu0 0.0
    %421 = vmatprep.subr.mxu0 0.0
    %422 = vmatpush1.msra.mxu0 0.0
    %423 = vmatprep.subr.mxu0 0.0
    %424 = vmatpush1.msra.mxu0 0.0
    %425 = vmatprep.subr.mxu0 0.0
    %426 = vmatpush1.msra.mxu0 0.0
    %427 = vmatprep.subr.mxu0 0.0
    %428 = vmatpush1.msra.mxu0 0.0
    %429 = vmatprep.subr.mxu0 0.0
    %430 = vmatpush1.msra.mxu0 0.0
    %431 = vmatprep.mubr.f32.mxu0 0.0
    %432 = vmatmul.mubr.f32.gmra.mrb[0].mxu0 %v365
    %v433 = vpop.f32.mrb[0].mxu0
    %v434 = vadd.f32 0.0, %v433
    %v435 = vpop.f32.mrb[0].mxu0
    %436 = vdwg.mxu0
    %v437 = vadd.f32 %v153, %v434
    %v438 = vxor.u32 %v437, 2147483648
    %v439 = vmul.f32 %v438, 1.442695
    %v440 = vpow.pop %v439
    %v441 = vadd.f32 %v440, 1.0
    %v442 = vrcp.pop %v441
    %v443 = vmul.f32 1.0, %v442
    %v444 = vtanh.pop %v437
    %v445 = vmul.f32 %v443, %v353
    %447 = vrot.lane.b32.xlu0 %v444, 96
    %v448 = vpop.permute.xlu0 %447
    %v450 = vmul.f32 %v443, %v448
    %452 = vrot.lane.b32.xlu0 %v450, 16
    %v453 = vpop.permute.xlu0 %452
    %v455 = vadd.f32 %v445, %v453
    %v456 = vtanh.pop %v455
    %458 = vrot.lane.b32.xlu0 %v456, 32
    %v459 = vpop.permute.xlu0 %458
    %v461 = vmul.f32 %v443, %v459
    %463 = vrot.lane.b32.xlu0 %v461, 80
    %v464 = vpop.permute.xlu0 %463
    %466 = vst.msk [vmem:[#allocation3 + $0x10] sm:$0xff] %vm159, %v464
    %v467 = vsel %vm159, %v464, 0
    %469 = vmatprep.subr.mxu0 0.0
    %470 = vmatpush1.msra.mxu0 %v128
    %471 = vmatprep.subr.mxu0 0.0
    %472 = vmatpush1.msra.mxu0 %v129
    %473 = vmatprep.subr.mxu0 0.0
    %474 = vmatpush1.msra.mxu0 0.0
    %475 = vmatprep.subr.mxu0 0.0
    %476 = vmatpush1.msra.mxu0 0.0
    %477 = vmatprep.subr.mxu0 0.0
    %478 = vmatpush1.msra.mxu0 0.0
    %479 = vmatprep.subr.mxu0 0.0
    %480 = vmatpush1.msra.mxu0 0.0
    %481 = vmatprep.subr.mxu0 0.0
    %482 = vmatpush1.msra.mxu0 0.0
    %483 = vmatprep.subr.mxu0 0.0
    %484 = vmatpush1.msra.mxu0 0.0
    %485 = vmatprep.subr.mxu0 0.0
    %486 = vmatpush1.msra.mxu0 0.0
    %487 = vmatprep.subr.mxu0 0.0
    %488 = vmatpush1.msra.mxu0 0.0
    %489 = vmatprep.subr.mxu0 0.0
    %490 = vmatpush1.msra.mxu0 0.0
    %491 = vmatprep.subr.mxu0 0.0
    %492 = vmatpush1.msra.mxu0 0.0
    %493 = vmatprep.subr.mxu0 0.0
    %494 = vmatpush1.msra.mxu0 0.0
    %495 = vmatprep.subr.mxu0 0.0
    %496 = vmatpush1.msra.mxu0 0.0
    %497 = vmatprep.subr.mxu0 0.0
    %498 = vmatpush1.msra.mxu0 0.0
    %499 = vmatprep.subr.mxu0 0.0
    %500 = vmatpush1.msra.mxu0 0.0
    %501 = vmatprep.subr.mxu0 0.0
    %502 = vmatpush1.msra.mxu0 0.0
    %503 = vmatprep.subr.mxu0 0.0
    %504 = vmatpush1.msra.mxu0 0.0
    %505 = vmatprep.subr.mxu0 0.0
    %506 = vmatpush1.msra.mxu0 0.0
    %507 = vmatprep.subr.mxu0 0.0
    %508 = vmatpush1.msra.mxu0 0.0
    %509 = vmatprep.subr.mxu0 0.0
    %510 = vmatpush1.msra.mxu0 0.0
    %511 = vmatprep.subr.mxu0 0.0
    %512 = vmatpush1.msra.mxu0 0.0
    %513 = vmatprep.subr.mxu0 0.0
    %514 = vmatpush1.msra.mxu0 0.0
    %515 = vmatprep.subr.mxu0 0.0
    %516 = vmatpush1.msra.mxu0 0.0
    %517 = vmatprep.subr.mxu0 0.0
    %518 = vmatpush1.msra.mxu0 0.0
    %519 = vmatprep.subr.mxu0 0.0
    %520 = vmatpush1.msra.mxu0 0.0
    %521 = vmatprep.subr.mxu0 0.0
    %522 = vmatpush1.msra.mxu0 0.0
    %523 = vmatprep.subr.mxu0 0.0
    %524 = vmatpush1.msra.mxu0 0.0
    %525 = vmatprep.subr.mxu0 0.0
    %526 = vmatpush1.msra.mxu0 0.0
    %527 = vmatprep.subr.mxu0 0.0
    %528 = vmatpush1.msra.mxu0 0.0
    %529 = vmatprep.subr.mxu0 0.0
    %530 = vmatpush1.msra.mxu0 0.0
    %531 = vmatprep.subr.mxu0 0.0
    %532 = vmatpush1.msra.mxu0 0.0
    %533 = vmatprep.mubr.f32.mxu0 0.0
    %534 = vmatmul.mubr.f32.gmra.mrb[0].mxu0 %v467
    %v535 = vpop.f32.mrb[0].mxu0
    %v536 = vadd.f32 0.0, %v535
    %v537 = vpop.f32.mrb[0].mxu0
    %538 = vdwg.mxu0
    %v539 = vadd.f32 %v154, %v536
    %v540 = vxor.u32 %v539, 2147483648
    %v541 = vmul.f32 %v540, 1.442695
    %v542 = vpow.pop %v541
    %v543 = vadd.f32 %v542, 1.0
    %v544 = vrcp.pop %v543
    %v545 = vmul.f32 1.0, %v544
    %v546 = vtanh.pop %v539
    %v547 = vmul.f32 %v545, %v455
    %549 = vrot.lane.b32.xlu0 %v546, 96
    %v550 = vpop.permute.xlu0 %549
    %v552 = vmul.f32 %v545, %v550
    %554 = vrot.lane.b32.xlu0 %v552, 16
    %v555 = vpop.permute.xlu0 %554
    %v557 = vadd.f32 %v547, %v555
    %v558 = vtanh.pop %v557
    %560 = vrot.lane.b32.xlu0 %v558, 32
    %v561 = vpop.permute.xlu0 %560
    %v563 = vmul.f32 %v545, %v561
    %565 = vrot.lane.b32.xlu0 %v563, 80
    %v566 = vpop.permute.xlu0 %565
    %568 = vst.msk [vmem:[#allocation3 + $0x18] sm:$0xff] %vm159, %v566
    %v569 = vsel %vm159, %v566, 0
    %571 = vmatprep.subr.mxu0 0.0
    %572 = vmatpush1.msra.mxu0 %v128
    %573 = vmatprep.subr.mxu0 0.0
    %574 = vmatpush1.msra.mxu0 %v129
    %575 = vmatprep.subr.mxu0 0.0
    %576 = vmatpush1.msra.mxu0 0.0
    %577 = vmatprep.subr.mxu0 0.0
    %578 = vmatpush1.msra.mxu0 0.0
    %579 = vmatprep.subr.mxu0 0.0
    %580 = vmatpush1.msra.mxu0 0.0
    %581 = vmatprep.subr.mxu0 0.0
    %582 = vmatpush1.msra.mxu0 0.0
    %583 = vmatprep.subr.mxu0 0.0
    %584 = vmatpush1.msra.mxu0 0.0
    %585 = vmatprep.subr.mxu0 0.0
    %586 = vmatpush1.msra.mxu0 0.0
    %587 = vmatprep.subr.mxu0 0.0
    %588 = vmatpush1.msra.mxu0 0.0
    %589 = vmatprep.subr.mxu0 0.0
    %590 = vmatpush1.msra.mxu0 0.0
    %591 = vmatprep.subr.mxu0 0.0
    %592 = vmatpush1.msra.mxu0 0.0
    %593 = vmatprep.subr.mxu0 0.0
    %594 = vmatpush1.msra.mxu0 0.0
    %595 = vmatprep.subr.mxu0 0.0
    %596 = vmatpush1.msra.mxu0 0.0
    %597 = vmatprep.subr.mxu0 0.0
    %598 = vmatpush1.msra.mxu0 0.0
    %599 = vmatprep.subr.mxu0 0.0
    %600 = vmatpush1.msra.mxu0 0.0
    %601 = vmatprep.subr.mxu0 0.0
    %602 = vmatpush1.msra.mxu0 0.0
    %603 = vmatprep.subr.mxu0 0.0
    %604 = vmatpush1.msra.mxu0 0.0
    %605 = vmatprep.subr.mxu0 0.0
    %606 = vmatpush1.msra.mxu0 0.0
    %607 = vmatprep.subr.mxu0 0.0
    %608 = vmatpush1.msra.mxu0 0.0
    %609 = vmatprep.subr.mxu0 0.0
    %610 = vmatpush1.msra.mxu0 0.0
    %611 = vmatprep.subr.mxu0 0.0
    %612 = vmatpush1.msra.mxu0 0.0
    %613 = vmatprep.subr.mxu0 0.0
    %614 = vmatpush1.msra.mxu0 0.0
    %615 = vmatprep.subr.mxu0 0.0
    %616 = vmatpush1.msra.mxu0 0.0
    %617 = vmatprep.subr.mxu0 0.0
    %618 = vmatpush1.msra.mxu0 0.0
    %619 = vmatprep.subr.mxu0 0.0
    %620 = vmatpush1.msra.mxu0 0.0
    %621 = vmatprep.subr.mxu0 0.0
    %622 = vmatpush1.msra.mxu0 0.0
    %623 = vmatprep.subr.mxu0 0.0
    %624 = vmatpush1.msra.mxu0 0.0
    %625 = vmatprep.subr.mxu0 0.0
    %626 = vmatpush1.msra.mxu0 0.0
    %627 = vmatprep.subr.mxu0 0.0
    %628 = vmatpush1.msra.mxu0 0.0
    %629 = vmatprep.subr.mxu0 0.0
    %630 = vmatpush1.msra.mxu0 0.0
    %631 = vmatprep.subr.mxu0 0.0
    %632 = vmatpush1.msra.mxu0 0.0
    %633 = vmatprep.subr.mxu0 0.0
    %634 = vmatpush1.msra.mxu0 0.0
    %635 = vmatprep.mubr.f32.mxu0 0.0
    %636 = vmatmul.mubr.f32.gmra.mrb[0].mxu0 %v569
    %v637 = vpop.f32.mrb[0].mxu0
    %v638 = vadd.f32 0.0, %v637
    %v639 = vpop.f32.mrb[0].mxu0
    %640 = vdwg.mxu0
    %v641 = vadd.f32 %v155, %v638
    %v642 = vxor.u32 %v641, 2147483648
    %v643 = vmul.f32 %v642, 1.442695
    %v644 = vpow.pop %v643
    %v645 = vadd.f32 %v644, 1.0
    %v646 = vrcp.pop %v645
    %v647 = vmul.f32 1.0, %v646
    %v648 = vtanh.pop %v641
    %v649 = vmul.f32 %v647, %v557
    %651 = vrot.lane.b32.xlu0 %v648, 96
    %v652 = vpop.permute.xlu0 %651
    %v654 = vmul.f32 %v647, %v652
    %656 = vrot.lane.b32.xlu0 %v654, 16
    %v657 = vpop.permute.xlu0 %656
    %v659 = vadd.f32 %v649, %v657
    %v660 = vtanh.pop %v659
    %662 = vrot.lane.b32.xlu0 %v660, 32
    %v663 = vpop.permute.xlu0 %662
    %v665 = vmul.f32 %v647, %v663
    %667 = vrot.lane.b32.xlu0 %v665, 80
    %v668 = vpop.permute.xlu0 %667
    %670 = vst.msk [vmem:[#allocation3 + $0x20] sm:$0xff] %vm159, %v668
    %v671 = vsel %vm159, %v668, 0
    %673 = vmatprep.subr.mxu0 0.0
    %674 = vmatpush1.msra.mxu0 %v128
    %675 = vmatprep.subr.mxu0 0.0
    %676 = vmatpush1.msra.mxu0 %v129
    %677 = vmatprep.subr.mxu0 0.0
    %678 = vmatpush1.msra.mxu0 0.0
    %679 = vmatprep.subr.mxu0 0.0
    %680 = vmatpush1.msra.mxu0 0.0
    %681 = vmatprep.subr.mxu0 0.0
    %682 = vmatpush1.msra.mxu0 0.0
    %683 = vmatprep.subr.mxu0 0.0
    %684 = vmatpush1.msra.mxu0 0.0
    %685 = vmatprep.subr.mxu0 0.0
    %686 = vmatpush1.msra.mxu0 0.0
    %687 = vmatprep.subr.mxu0 0.0
    %688 = vmatpush1.msra.mxu0 0.0
    %689 = vmatprep.subr.mxu0 0.0
    %690 = vmatpush1.msra.mxu0 0.0
    %691 = vmatprep.subr.mxu0 0.0
    %692 = vmatpush1.msra.mxu0 0.0
    %693 = vmatprep.subr.mxu0 0.0
    %694 = vmatpush1.msra.mxu0 0.0
    %695 = vmatprep.subr.mxu0 0.0
    %696 = vmatpush1.msra.mxu0 0.0
    %697 = vmatprep.subr.mxu0 0.0
    %698 = vmatpush1.msra.mxu0 0.0
    %699 = vmatprep.subr.mxu0 0.0
    %700 = vmatpush1.msra.mxu0 0.0
    %701 = vmatprep.subr.mxu0 0.0
    %702 = vmatpush1.msra.mxu0 0.0
    %703 = vmatprep.subr.mxu0 0.0
    %704 = vmatpush1.msra.mxu0 0.0
    %705 = vmatprep.subr.mxu0 0.0
    %706 = vmatpush1.msra.mxu0 0.0
    %707 = vmatprep.subr.mxu0 0.0
    %708 = vmatpush1.msra.mxu0 0.0
    %709 = vmatprep.subr.mxu0 0.0
    %710 = vmatpush1.msra.mxu0 0.0
    %711 = vmatprep.subr.mxu0 0.0
    %712 = vmatpush1.msra.mxu0 0.0
    %713 = vmatprep.subr.mxu0 0.0
    %714 = vmatpush1.msra.mxu0 0.0
    %715 = vmatprep.subr.mxu0 0.0
    %716 = vmatpush1.msra.mxu0 0.0
    %717 = vmatprep.subr.mxu0 0.0
    %718 = vmatpush1.msra.mxu0 0.0
    %719 = vmatprep.subr.mxu0 0.0
    %720 = vmatpush1.msra.mxu0 0.0
    %721 = vmatprep.subr.mxu0 0.0
    %722 = vmatpush1.msra.mxu0 0.0
    %723 = vmatprep.subr.mxu0 0.0
    %724 = vmatpush1.msra.mxu0 0.0
    %725 = vmatprep.subr.mxu0 0.0
    %726 = vmatpush1.msra.mxu0 0.0
    %727 = vmatprep.subr.mxu0 0.0
    %728 = vmatpush1.msra.mxu0 0.0
    %729 = vmatprep.subr.mxu0 0.0
    %730 = vmatpush1.msra.mxu0 0.0
    %731 = vmatprep.subr.mxu0 0.0
    %732 = vmatpush1.msra.mxu0 0.0
    %733 = vmatprep.subr.mxu0 0.0
    %734 = vmatpush1.msra.mxu0 0.0
    %735 = vmatprep.subr.mxu0 0.0
    %736 = vmatpush1.msra.mxu0 0.0
    %737 = vmatprep.mubr.f32.mxu0 0.0
    %738 = vmatmul.mubr.f32.gmra.mrb[0].mxu0 %v671
    %v739 = vpop.f32.mrb[0].mxu0
    %v740 = vadd.f32 0.0, %v739
    %v741 = vpop.f32.mrb[0].mxu0
    %742 = vdwg.mxu0
    %v743 = vadd.f32 %v156, %v740
    %v744 = vxor.u32 %v743, 2147483648
    %v745 = vmul.f32 %v744, 1.442695
    %v746 = vpow.pop %v745
    %v747 = vadd.f32 %v746, 1.0
    %v748 = vrcp.pop %v747
    %v749 = vmul.f32 1.0, %v748
    %v750 = vtanh.pop %v743
    %v751 = vmul.f32 %v749, %v659
    %753 = vrot.lane.b32.xlu0 %v750, 96
    %v754 = vpop.permute.xlu0 %753
    %v756 = vmul.f32 %v749, %v754
    %758 = vrot.lane.b32.xlu0 %v756, 16
    %v759 = vpop.permute.xlu0 %758
    %v761 = vadd.f32 %v751, %v759
    %v762 = vtanh.pop %v761
    %764 = vrot.lane.b32.xlu0 %v762, 32
    %v765 = vpop.permute.xlu0 %764
    %v767 = vmul.f32 %v749, %v765
    %769 = vrot.lane.b32.xlu0 %v767, 80
    %v770 = vpop.permute.xlu0 %769
    %772 = vst.msk [vmem:[#allocation3 + $0x28] sm:$0xff] %vm159, %v770
    %v773 = vsel %vm159, %v770, 0
    %775 = vmatprep.subr.mxu0 0.0
    %776 = vmatpush1.msra.mxu0 %v128
    %777 = vmatprep.subr.mxu0 0.0
    %778 = vmatpush1.msra.mxu0 %v129
    %779 = vmatprep.subr.mxu0 0.0
    %780 = vmatpush1.msra.mxu0 0.0
    %781 = vmatprep.subr.mxu0 0.0
    %782 = vmatpush1.msra.mxu0 0.0
    %783 = vmatprep.subr.mxu0 0.0
    %784 = vmatpush1.msra.mxu0 0.0
    %785 = vmatprep.subr.mxu0 0.0
    %786 = vmatpush1.msra.mxu0 0.0
    %787 = vmatprep.subr.mxu0 0.0
    %788 = vmatpush1.msra.mxu0 0.0
    %789 = vmatprep.subr.mxu0 0.0
    %790 = vmatpush1.msra.mxu0 0.0
    %791 = vmatprep.subr.mxu0 0.0
    %792 = vmatpush1.msra.mxu0 0.0
    %793 = vmatprep.subr.mxu0 0.0
    %794 = vmatpush1.msra.mxu0 0.0
    %795 = vmatprep.subr.mxu0 0.0
    %796 = vmatpush1.msra.mxu0 0.0
    %797 = vmatprep.subr.mxu0 0.0
    %798 = vmatpush1.msra.mxu0 0.0
    %799 = vmatprep.subr.mxu0 0.0
    %800 = vmatpush1.msra.mxu0 0.0
    %801 = vmatprep.subr.mxu0 0.0
    %802 = vmatpush1.msra.mxu0 0.0
    %803 = vmatprep.subr.mxu0 0.0
    %804 = vmatpush1.msra.mxu0 0.0
    %805 = vmatprep.subr.mxu0 0.0
    %806 = vmatpush1.msra.mxu0 0.0
    %807 = vmatprep.subr.mxu0 0.0
    %808 = vmatpush1.msra.mxu0 0.0
    %809 = vmatprep.subr.mxu0 0.0
    %810 = vmatpush1.msra.mxu0 0.0
    %811 = vmatprep.subr.mxu0 0.0
    %812 = vmatpush1.msra.mxu0 0.0
    %813 = vmatprep.subr.mxu0 0.0
    %814 = vmatpush1.msra.mxu0 0.0
    %815 = vmatprep.subr.mxu0 0.0
    %816 = vmatpush1.msra.mxu0 0.0
    %817 = vmatprep.subr.mxu0 0.0
    %818 = vmatpush1.msra.mxu0 0.0
    %819 = vmatprep.subr.mxu0 0.0
    %820 = vmatpush1.msra.mxu0 0.0
    %821 = vmatprep.subr.mxu0 0.0
    %822 = vmatpush1.msra.mxu0 0.0
    %823 = vmatprep.subr.mxu0 0.0
    %824 = vmatpush1.msra.mxu0 0.0
    %825 = vmatprep.subr.mxu0 0.0
    %826 = vmatpush1.msra.mxu0 0.0
    %827 = vmatprep.subr.mxu0 0.0
    %828 = vmatpush1.msra.mxu0 0.0
    %829 = vmatprep.subr.mxu0 0.0
    %830 = vmatpush1.msra.mxu0 0.0
    %831 = vmatprep.subr.mxu0 0.0
    %832 = vmatpush1.msra.mxu0 0.0
    %833 = vmatprep.subr.mxu0 0.0
    %834 = vmatpush1.msra.mxu0 0.0
    %835 = vmatprep.subr.mxu0 0.0
    %836 = vmatpush1.msra.mxu0 0.0
    %837 = vmatprep.subr.mxu0 0.0
    %838 = vmatpush1.msra.mxu0 0.0
    %839 = vmatprep.mubr.f32.mxu0 0.0
    %840 = vmatmul.mubr.f32.gmra.mrb[0].mxu0 %v773
    %v841 = vpop.f32.mrb[0].mxu0
    %v842 = vadd.f32 0.0, %v841
    %v843 = vpop.f32.mrb[0].mxu0
    %844 = vdwg.mxu0
    %v845 = vadd.f32 %v157, %v842
    %v846 = vxor.u32 %v845, 2147483648
    %v847 = vmul.f32 %v846, 1.442695
    %v848 = vpow.pop %v847
    %v849 = vadd.f32 %v848, 1.0
    %v850 = vrcp.pop %v849
    %v851 = vmul.f32 1.0, %v850
    %v852 = vtanh.pop %v845
    %v853 = vmul.f32 %v851, %v761
    %855 = vrot.lane.b32.xlu0 %v852, 96
    %v856 = vpop.permute.xlu0 %855
    %v858 = vmul.f32 %v851, %v856
    %860 = vrot.lane.b32.xlu0 %v858, 16
    %v861 = vpop.permute.xlu0 %860
    %v863 = vadd.f32 %v853, %v861
    %v864 = vtanh.pop %v863
    %866 = vrot.lane.b32.xlu0 %v864, 32
    %v867 = vpop.permute.xlu0 %866
    %v869 = vmul.f32 %v851, %v867
    %871 = vrot.lane.b32.xlu0 %v869, 80
    %v872 = vpop.permute.xlu0 %871
    %874 = vst.msk [vmem:[#allocation3 + $0x30] sm:$0xff] %vm159, %v872
    %v875 = vsel %vm159, %v872, 0
    %877 = vmatprep.subr.mxu0 0.0
    %878 = vmatpush1.msra.mxu0 %v128
    %879 = vmatprep.subr.mxu0 0.0
    %880 = vmatpush1.msra.mxu0 %v129
    %881 = vmatprep.subr.mxu0 0.0
    %882 = vmatpush1.msra.mxu0 0.0
    %883 = vmatprep.subr.mxu0 0.0
    %884 = vmatpush1.msra.mxu0 0.0
    %885 = vmatprep.subr.mxu0 0.0
    %886 = vmatpush1.msra.mxu0 0.0
    %887 = vmatprep.subr.mxu0 0.0
    %888 = vmatpush1.msra.mxu0 0.0
    %889 = vmatprep.subr.mxu0 0.0
    %890 = vmatpush1.msra.mxu0 0.0
    %891 = vmatprep.subr.mxu0 0.0
    %892 = vmatpush1.msra.mxu0 0.0
    %893 = vmatprep.subr.mxu0 0.0
    %894 = vmatpush1.msra.mxu0 0.0
    %895 = vmatprep.subr.mxu0 0.0
    %896 = vmatpush1.msra.mxu0 0.0
    %897 = vmatprep.subr.mxu0 0.0
    %898 = vmatpush1.msra.mxu0 0.0
    %899 = vmatprep.subr.mxu0 0.0
    %900 = vmatpush1.msra.mxu0 0.0
    %901 = vmatprep.subr.mxu0 0.0
    %902 = vmatpush1.msra.mxu0 0.0
    %903 = vmatprep.subr.mxu0 0.0
    %904 = vmatpush1.msra.mxu0 0.0
    %905 = vmatprep.subr.mxu0 0.0
    %906 = vmatpush1.msra.mxu0 0.0
    %907 = vmatprep.subr.mxu0 0.0
    %908 = vmatpush1.msra.mxu0 0.0
    %909 = vmatprep.subr.mxu0 0.0
    %910 = vmatpush1.msra.mxu0 0.0
    %911 = vmatprep.subr.mxu0 0.0
    %912 = vmatpush1.msra.mxu0 0.0
    %913 = vmatprep.subr.mxu0 0.0
    %914 = vmatpush1.msra.mxu0 0.0
    %915 = vmatprep.subr.mxu0 0.0
    %916 = vmatpush1.msra.mxu0 0.0
    %917 = vmatprep.subr.mxu0 0.0
    %918 = vmatpush1.msra.mxu0 0.0
    %919 = vmatprep.subr.mxu0 0.0
    %920 = vmatpush1.msra.mxu0 0.0
    %921 = vmatprep.subr.mxu0 0.0
    %922 = vmatpush1.msra.mxu0 0.0
    %923 = vmatprep.subr.mxu0 0.0
    %924 = vmatpush1.msra.mxu0 0.0
    %925 = vmatprep.subr.mxu0 0.0
    %926 = vmatpush1.msra.mxu0 0.0
    %927 = vmatprep.subr.mxu0 0.0
    %928 = vmatpush1.msra.mxu0 0.0
    %929 = vmatprep.subr.mxu0 0.0
    %930 = vmatpush1.msra.mxu0 0.0
    %931 = vmatprep.subr.mxu0 0.0
    %932 = vmatpush1.msra.mxu0 0.0
    %933 = vmatprep.subr.mxu0 0.0
    %934 = vmatpush1.msra.mxu0 0.0
    %935 = vmatprep.subr.mxu0 0.0
    %936 = vmatpush1.msra.mxu0 0.0
    %937 = vmatprep.subr.mxu0 0.0
    %938 = vmatpush1.msra.mxu0 0.0
    %939 = vmatprep.subr.mxu0 0.0
    %940 = vmatpush1.msra.mxu0 0.0
    %941 = vmatprep.mubr.f32.mxu0 0.0
    %942 = vmatmul.mubr.f32.gmra.mrb[0].mxu0 %v875
    %v943 = vpop.f32.mrb[0].mxu0
    %v944 = vadd.f32 0.0, %v943
    %v945 = vpop.f32.mrb[0].mxu0
    %946 = vdwg.mxu0
    %v947 = vadd.f32 %v158, %v944
    %v948 = vxor.u32 %v947, 2147483648
    %v949 = vmul.f32 %v948, 1.442695
    %v950 = vpow.pop %v949
    %v951 = vadd.f32 %v950, 1.0
    %v952 = vrcp.pop %v951
    %v953 = vmul.f32 1.0, %v952
    %v954 = vtanh.pop %v947
    %v955 = vmul.f32 %v953, %v863
    %957 = vrot.lane.b32.xlu0 %v954, 96
    %v958 = vpop.permute.xlu0 %957
    %v960 = vmul.f32 %v953, %v958
    %962 = vrot.lane.b32.xlu0 %v960, 16
    %v963 = vpop.permute.xlu0 %962
    %v965 = vadd.f32 %v955, %v963
    %v966 = vtanh.pop %v965
    %968 = vrot.lane.b32.xlu0 %v966, 32
    %v969 = vpop.permute.xlu0 %968
    %v971 = vmul.f32 %v953, %v969
    %973 = vrot.lane.b32.xlu0 %v971, 80
    %v974 = vpop.permute.xlu0 %973
    %976 = vst.msk [vmem:[#allocation3 + $0x38] sm:$0xff] %vm159, %v974
    %v977 = vld [vmem:[#allocation3] sm:$0xff]
    %v978 = vld [vmem:[#allocation3 + $0x8] sm:$0xff]
    %v979 = vld [vmem:[#allocation3 + $0x10] sm:$0xff]
    %v980 = vld [vmem:[#allocation3 + $0x18] sm:$0xff]
    %v981 = vld [vmem:[#allocation3 + $0x20] sm:$0xff]
    %v982 = vld [vmem:[#allocation3 + $0x28] sm:$0xff]
    %v983 = vld [vmem:[#allocation3 + $0x30] sm:$0xff]
    %v984 = vld [vmem:[#allocation3 + $0x38] sm:$0xff]
    %v985 = vlaneseq
    %v986 = vshrl.u32 %v985, 7
    %v987 = vsub.s32 0, %v986
    %v988 = vrot.slane %v135, %v987
    %v990 = vsel %vm159, %v977, 0
    %v993 = vsel %vm159, %v978, 0
    %v996 = vsel %vm159, %v979, 0
    %v999 = vsel %vm159, %v980, 0
    %v1002 = vsel %vm159, %v981, 0
    %v1005 = vsel %vm159, %v982, 0
    %v1008 = vsel %vm159, %v983, 0
    %v1011 = vsel %vm159, %v984, 0
    %1013 = vmatprep.subr.mxu0 0.0
    %1014 = vmatpush1.msra.mxu0 %v131
    %1015 = vmatprep.subr.mxu0 0.0
    %1016 = vmatpush1.msra.mxu0 %v132
    %1017 = vmatprep.subr.mxu0 0.0
    %1018 = vmatpush1.msra.mxu0 0.0
    %1019 = vmatprep.subr.mxu0 0.0
    %1020 = vmatpush1.msra.mxu0 0.0
    %1021 = vmatprep.subr.mxu0 0.0
    %1022 = vmatpush1.msra.mxu0 0.0
    %1023 = vmatprep.subr.mxu0 0.0
    %1024 = vmatpush1.msra.mxu0 0.0
    %1025 = vmatprep.subr.mxu0 0.0
    %1026 = vmatpush1.msra.mxu0 0.0
    %1027 = vmatprep.subr.mxu0 0.0
    %1028 = vmatpush1.msra.mxu0 0.0
    %1029 = vmatprep.subr.mxu0 0.0
    %1030 = vmatpush1.msra.mxu0 0.0
    %1031 = vmatprep.subr.mxu0 0.0
    %1032 = vmatpush1.msra.mxu0 0.0
    %1033 = vmatprep.subr.mxu0 0.0
    %1034 = vmatpush1.msra.mxu0 0.0
    %1035 = vmatprep.subr.mxu0 0.0
    %1036 = vmatpush1.msra.mxu0 0.0
    %1037 = vmatprep.subr.mxu0 0.0
    %1038 = vmatpush1.msra.mxu0 0.0
    %1039 = vmatprep.subr.mxu0 0.0
    %1040 = vmatpush1.msra.mxu0 0.0
    %1041 = vmatprep.subr.mxu0 0.0
    %1042 = vmatpush1.msra.mxu0 0.0
    %1043 = vmatprep.subr.mxu0 0.0
    %1044 = vmatpush1.msra.mxu0 0.0
    %1045 = vmatprep.subr.mxu0 0.0
    %1046 = vmatpush1.msra.mxu0 0.0
    %1047 = vmatprep.subr.mxu0 0.0
    %1048 = vmatpush1.msra.mxu0 0.0
    %1049 = vmatprep.subr.mxu0 0.0
    %1050 = vmatpush1.msra.mxu0 0.0
    %1051 = vmatprep.subr.mxu0 0.0
    %1052 = vmatpush1.msra.mxu0 0.0
    %1053 = vmatprep.subr.mxu0 0.0
    %1054 = vmatpush1.msra.mxu0 0.0
    %1055 = vmatprep.subr.mxu0 0.0
    %1056 = vmatpush1.msra.mxu0 0.0
    %1057 = vmatprep.subr.mxu0 0.0
    %1058 = vmatpush1.msra.mxu0 0.0
    %1059 = vmatprep.subr.mxu0 0.0
    %1060 = vmatpush1.msra.mxu0 0.0
    %1061 = vmatprep.subr.mxu0 0.0
    %1062 = vmatpush1.msra.mxu0 0.0
    %1063 = vmatprep.subr.mxu0 0.0
    %1064 = vmatpush1.msra.mxu0 0.0
    %1065 = vmatprep.subr.mxu0 0.0
    %1066 = vmatpush1.msra.mxu0 0.0
    %1067 = vmatprep.subr.mxu0 0.0
    %1068 = vmatpush1.msra.mxu0 0.0
    %1069 = vmatprep.subr.mxu0 0.0
    %1070 = vmatpush1.msra.mxu0 0.0
    %1071 = vmatprep.subr.mxu0 0.0
    %1072 = vmatpush1.msra.mxu0 0.0
    %1073 = vmatprep.subr.mxu0 0.0
    %1074 = vmatpush1.msra.mxu0 0.0
    %1075 = vmatprep.subr.mxu0 0.0
    %1076 = vmatpush1.msra.mxu0 0.0
    %1077 = vmatprep.mubr.f32.mxu0 0.0
    %1078 = vmatmul.mubr.f32.gmra.mrb[0].mxu0 %v990
    %v1079 = vpop.f32.mrb[0].mxu0
    %v1080 = vadd.f32 %v988, %v1079
    %v1081 = vpop.f32.mrb[0].mxu0
    %1082 = vmatprep.mubr.f32.mxu0 0.0
    %1083 = vmatmul.mubr.f32.gmra.mrb[0].mxu0 %v993
    %v1084 = vpop.f32.mrb[0].mxu0
    %v1085 = vadd.f32 %v988, %v1084
    %v1086 = vpop.f32.mrb[0].mxu0
    %1087 = vmatprep.mubr.f32.mxu0 0.0
    %1088 = vmatmul.mubr.f32.gmra.mrb[0].mxu0 %v996
    %v1089 = vpop.f32.mrb[0].mxu0
    %v1090 = vadd.f32 %v988, %v1089
    %v1091 = vpop.f32.mrb[0].mxu0
    %1092 = vmatprep.mubr.f32.mxu0 0.0
    %1093 = vmatmul.mubr.f32.gmra.mrb[0].mxu0 %v999
    %v1094 = vpop.f32.mrb[0].mxu0
    %v1095 = vadd.f32 %v988, %v1094
    %v1096 = vpop.f32.mrb[0].mxu0
    %1097 = vmatprep.mubr.f32.mxu0 0.0
    %1098 = vmatmul.mubr.f32.gmra.mrb[0].mxu0 %v1002
    %v1099 = vpop.f32.mrb[0].mxu0
    %v1100 = vadd.f32 %v988, %v1099
    %v1101 = vpop.f32.mrb[0].mxu0
    %1102 = vmatprep.mubr.f32.mxu0 0.0
    %1103 = vmatmul.mubr.f32.gmra.mrb[0].mxu0 %v1005
    %v1104 = vpop.f32.mrb[0].mxu0
    %v1105 = vadd.f32 %v988, %v1104
    %v1106 = vpop.f32.mrb[0].mxu0
    %1107 = vmatprep.mubr.f32.mxu0 0.0
    %1108 = vmatmul.mubr.f32.gmra.mrb[0].mxu0 %v1008
    %v1109 = vpop.f32.mrb[0].mxu0
    %v1110 = vadd.f32 %v988, %v1109
    %v1111 = vpop.f32.mrb[0].mxu0
    %1112 = vmatprep.mubr.f32.mxu0 0.0
    %1113 = vmatmul.mubr.f32.gmra.mrb[0].mxu0 %v1011
    %v1114 = vpop.f32.mrb[0].mxu0
    %v1115 = vadd.f32 %v988, %v1114
    %v1116 = vpop.f32.mrb[0].mxu0
    %1117 = vdwg.mxu0
    %1118 = vmatprep.subr.mxu0 0.0
    %1119 = vmatpush1.msra.mxu0 %v133
    %1120 = vmatprep.subr.mxu0 0.0
    %1121 = vmatpush1.msra.mxu0 %v134
    %1122 = vmatprep.subr.mxu0 0.0
    %1123 = vmatpush1.msra.mxu0 0.0
    %1124 = vmatprep.subr.mxu0 0.0
    %1125 = vmatpush1.msra.mxu0 0.0
    %1126 = vmatprep.subr.mxu0 0.0
    %1127 = vmatpush1.msra.mxu0 0.0
    %1128 = vmatprep.subr.mxu0 0.0
    %1129 = vmatpush1.msra.mxu0 0.0
    %1130 = vmatprep.subr.mxu0 0.0
    %1131 = vmatpush1.msra.mxu0 0.0
    %1132 = vmatprep.subr.mxu0 0.0
    %1133 = vmatpush1.msra.mxu0 0.0
    %1134 = vmatprep.subr.mxu0 0.0
    %1135 = vmatpush1.msra.mxu0 0.0
    %1136 = vmatprep.subr.mxu0 0.0
    %1137 = vmatpush1.msra.mxu0 0.0
    %1138 = vmatprep.subr.mxu0 0.0
    %1139 = vmatpush1.msra.mxu0 0.0
    %1140 = vmatprep.subr.mxu0 0.0
    %1141 = vmatpush1.msra.mxu0 0.0
    %1142 = vmatprep.subr.mxu0 0.0
    %1143 = vmatpush1.msra.mxu0 0.0
    %1144 = vmatprep.subr.mxu0 0.0
    %1145 = vmatpush1.msra.mxu0 0.0
    %1146 = vmatprep.subr.mxu0 0.0
    %1147 = vmatpush1.msra.mxu0 0.0
    %1148 = vmatprep.subr.mxu0 0.0
    %1149 = vmatpush1.msra.mxu0 0.0
    %1150 = vmatprep.subr.mxu0 0.0
    %1151 = vmatpush1.msra.mxu0 0.0
    %1152 = vmatprep.subr.mxu0 0.0
    %1153 = vmatpush1.msra.mxu0 0.0
    %1154 = vmatprep.subr.mxu0 0.0
    %1155 = vmatpush1.msra.mxu0 0.0
    %1156 = vmatprep.subr.mxu0 0.0
    %1157 = vmatpush1.msra.mxu0 0.0
    %1158 = vmatprep.subr.mxu0 0.0
    %1159 = vmatpush1.msra.mxu0 0.0
    %1160 = vmatprep.subr.mxu0 0.0
    %1161 = vmatpush1.msra.mxu0 0.0
    %1162 = vmatprep.subr.mxu0 0.0
    %1163 = vmatpush1.msra.mxu0 0.0
    %1164 = vmatprep.subr.mxu0 0.0
    %1165 = vmatpush1.msra.mxu0 0.0
    %1166 = vmatprep.subr.mxu0 0.0
    %1167 = vmatpush1.msra.mxu0 0.0
    %1168 = vmatprep.subr.mxu0 0.0
    %1169 = vmatpush1.msra.mxu0 0.0
    %1170 = vmatprep.subr.mxu0 0.0
    %1171 = vmatpush1.msra.mxu0 0.0
    %1172 = vmatprep.subr.mxu0 0.0
    %1173 = vmatpush1.msra.mxu0 0.0
    %1174 = vmatprep.subr.mxu0 0.0
    %1175 = vmatpush1.msra.mxu0 0.0
    %1176 = vmatprep.subr.mxu0 0.0
    %1177 = vmatpush1.msra.mxu0 0.0
    %1178 = vmatprep.subr.mxu0 0.0
    %1179 = vmatpush1.msra.mxu0 0.0
    %1180 = vmatprep.subr.mxu0 0.0
    %1181 = vmatpush1.msra.mxu0 0.0
    %1182 = vmatprep.mubr.f32.mxu0 0.0
    %1183 = vmatmul.mubr.f32.gmra.mrb[0].mxu0 %v161
    %v1184 = vpop.f32.mrb[0].mxu0
    %v1185 = vadd.f32 0.0, %v1184
    %v1186 = vpop.f32.mrb[0].mxu0
    %1187 = vdwg.mxu0
    %v1188 = vadd.f32 %v1080, %v1185
    %v1189 = vxor.u32 %v1188, 2147483648
    %v1190 = vmul.f32 %v1189, 1.442695
    %v1191 = vpow.pop %v1190
    %v1192 = vadd.f32 %v1191, 1.0
    %v1193 = vrcp.pop %v1192
    %v1194 = vmul.f32 1.0, %v1193
    %v1195 = vtanh.pop %v1188
    %v1196 = vmul.f32 %v1194, 0.0
    %1198 = vrot.lane.b32.xlu0 %v1195, 96
    %v1199 = vpop.permute.xlu0 %1198
    %v1201 = vmul.f32 %v1194, %v1199
    %1203 = vrot.lane.b32.xlu0 %v1201, 16
    %v1204 = vpop.permute.xlu0 %1203
    %v1206 = vadd.f32 %v1196, %v1204
    %v1207 = vtanh.pop %v1206
    %1209 = vrot.lane.b32.xlu0 %v1207, 32
    %v1210 = vpop.permute.xlu0 %1209
    %v1212 = vmul.f32 %v1194, %v1210
    %1214 = vrot.lane.b32.xlu0 %v1212, 80
    %v1215 = vpop.permute.xlu0 %1214
    %vm1217 = vcmask 122880
    %1218 = vst.msk [vmem:[#allocation4] sm:$0x1] %vm1217, %v1215
    %vm1219 = vcmask 123905
    %1220 = vst.msk [vmem:[#allocation4 + $0x7] sm:$0x2] %vm1219, %v1215
    %v1221 = vsel %vm159, %v1215, 0
    %1223 = vmatprep.subr.mxu0 0.0
    %1224 = vmatpush1.msra.mxu0 %v133
    %1225 = vmatprep.subr.mxu0 0.0
    %1226 = vmatpush1.msra.mxu0 %v134
    %1227 = vmatprep.subr.mxu0 0.0
    %1228 = vmatpush1.msra.mxu0 0.0
    %1229 = vmatprep.subr.mxu0 0.0
    %1230 = vmatpush1.msra.mxu0 0.0
    %1231 = vmatprep.subr.mxu0 0.0
    %1232 = vmatpush1.msra.mxu0 0.0
    %1233 = vmatprep.subr.mxu0 0.0
    %1234 = vmatpush1.msra.mxu0 0.0
    %1235 = vmatprep.subr.mxu0 0.0
    %1236 = vmatpush1.msra.mxu0 0.0
    %1237 = vmatprep.subr.mxu0 0.0
    %1238 = vmatpush1.msra.mxu0 0.0
    %1239 = vmatprep.subr.mxu0 0.0
    %1240 = vmatpush1.msra.mxu0 0.0
    %1241 = vmatprep.subr.mxu0 0.0
    %1242 = vmatpush1.msra.mxu0 0.0
    %1243 = vmatprep.subr.mxu0 0.0
    %1244 = vmatpush1.msra.mxu0 0.0
    %1245 = vmatprep.subr.mxu0 0.0
    %1246 = vmatpush1.msra.mxu0 0.0
    %1247 = vmatprep.subr.mxu0 0.0
    %1248 = vmatpush1.msra.mxu0 0.0
    %1249 = vmatprep.subr.mxu0 0.0
    %1250 = vmatpush1.msra.mxu0 0.0
    %1251 = vmatprep.subr.mxu0 0.0
    %1252 = vmatpush1.msra.mxu0 0.0
    %1253 = vmatprep.subr.mxu0 0.0
    %1254 = vmatpush1.msra.mxu0 0.0
    %1255 = vmatprep.subr.mxu0 0.0
    %1256 = vmatpush1.msra.mxu0 0.0
    %1257 = vmatprep.subr.mxu0 0.0
    %1258 = vmatpush1.msra.mxu0 0.0
    %1259 = vmatprep.subr.mxu0 0.0
    %1260 = vmatpush1.msra.mxu0 0.0
    %1261 = vmatprep.subr.mxu0 0.0
    %1262 = vmatpush1.msra.mxu0 0.0
    %1263 = vmatprep.subr.mxu0 0.0
    %1264 = vmatpush1.msra.mxu0 0.0
    %1265 = vmatprep.subr.mxu0 0.0
    %1266 = vmatpush1.msra.mxu0 0.0
    %1267 = vmatprep.subr.mxu0 0.0
    %1268 = vmatpush1.msra.mxu0 0.0
    %1269 = vmatprep.subr.mxu0 0.0
    %1270 = vmatpush1.msra.mxu0 0.0
    %1271 = vmatprep.subr.mxu0 0.0
    %1272 = vmatpush1.msra.mxu0 0.0
    %1273 = vmatprep.subr.mxu0 0.0
    %1274 = vmatpush1.msra.mxu0 0.0
    %1275 = vmatprep.subr.mxu0 0.0
    %1276 = vmatpush1.msra.mxu0 0.0
    %1277 = vmatprep.subr.mxu0 0.0
    %1278 = vmatpush1.msra.mxu0 0.0
    %1279 = vmatprep.subr.mxu0 0.0
    %1280 = vmatpush1.msra.mxu0 0.0
    %1281 = vmatprep.subr.mxu0 0.0
    %1282 = vmatpush1.msra.mxu0 0.0
    %1283 = vmatprep.subr.mxu0 0.0
    %1284 = vmatpush1.msra.mxu0 0.0
    %1285 = vmatprep.subr.mxu0 0.0
    %1286 = vmatpush1.msra.mxu0 0.0
    %1287 = vmatprep.mubr.f32.mxu0 0.0
    %1288 = vmatmul.mubr.f32.gmra.mrb[0].mxu0 %v1221
    %v1289 = vpop.f32.mrb[0].mxu0
    %v1290 = vadd.f32 0.0, %v1289
    %v1291 = vpop.f32.mrb[0].mxu0
    %1292 = vdwg.mxu0
    %v1293 = vadd.f32 %v1085, %v1290
    %v1294 = vxor.u32 %v1293, 2147483648
    %v1295 = vmul.f32 %v1294, 1.442695
    %v1296 = vpow.pop %v1295
    %v1297 = vadd.f32 %v1296, 1.0
    %v1298 = vrcp.pop %v1297
    %v1299 = vmul.f32 1.0, %v1298
    %v1300 = vtanh.pop %v1293
    %v1301 = vmul.f32 %v1299, %v1206
    %1303 = vrot.lane.b32.xlu0 %v1300, 96
    %v1304 = vpop.permute.xlu0 %1303
    %v1306 = vmul.f32 %v1299, %v1304
    %1308 = vrot.lane.b32.xlu0 %v1306, 16
    %v1309 = vpop.permute.xlu0 %1308
    %v1311 = vadd.f32 %v1301, %v1309
    %v1312 = vtanh.pop %v1311
    %1314 = vrot.lane.b32.xlu0 %v1312, 32
    %v1315 = vpop.permute.xlu0 %1314
    %v1317 = vmul.f32 %v1299, %v1315
    %1319 = vrot.lane.b32.xlu0 %v1317, 80
    %v1320 = vpop.permute.xlu0 %1319
    %1322 = vst.msk [vmem:[#allocation4 + $0x1] sm:$0x1] %vm1217, %v1320
    %1323 = vst.msk [vmem:[#allocation4 + $0x8] sm:$0x2] %vm1219, %v1320
    %v1324 = vsel %vm159, %v1320, 0
    %1326 = vmatprep.subr.mxu0 0.0
    %1327 = vmatpush1.msra.mxu0 %v133
    %1328 = vmatprep.subr.mxu0 0.0
    %1329 = vmatpush1.msra.mxu0 %v134
    %1330 = vmatprep.subr.mxu0 0.0
    %1331 = vmatpush1.msra.mxu0 0.0
    %1332 = vmatprep.subr.mxu0 0.0
    %1333 = vmatpush1.msra.mxu0 0.0
    %1334 = vmatprep.subr.mxu0 0.0
    %1335 = vmatpush1.msra.mxu0 0.0
    %1336 = vmatprep.subr.mxu0 0.0
    %1337 = vmatpush1.msra.mxu0 0.0
    %1338 = vmatprep.subr.mxu0 0.0
    %1339 = vmatpush1.msra.mxu0 0.0
    %1340 = vmatprep.subr.mxu0 0.0
    %1341 = vmatpush1.msra.mxu0 0.0
    %1342 = vmatprep.subr.mxu0 0.0
    %1343 = vmatpush1.msra.mxu0 0.0
    %1344 = vmatprep.subr.mxu0 0.0
    %1345 = vmatpush1.msra.mxu0 0.0
    %1346 = vmatprep.subr.mxu0 0.0
    %1347 = vmatpush1.msra.mxu0 0.0
    %1348 = vmatprep.subr.mxu0 0.0
    %1349 = vmatpush1.msra.mxu0 0.0
    %1350 = vmatprep.subr.mxu0 0.0
    %1351 = vmatpush1.msra.mxu0 0.0
    %1352 = vmatprep.subr.mxu0 0.0
    %1353 = vmatpush1.msra.mxu0 0.0
    %1354 = vmatprep.subr.mxu0 0.0
    %1355 = vmatpush1.msra.mxu0 0.0
    %1356 = vmatprep.subr.mxu0 0.0
    %1357 = vmatpush1.msra.mxu0 0.0
    %1358 = vmatprep.subr.mxu0 0.0
    %1359 = vmatpush1.msra.mxu0 0.0
    %1360 = vmatprep.subr.mxu0 0.0
    %1361 = vmatpush1.msra.mxu0 0.0
    %1362 = vmatprep.subr.mxu0 0.0
    %1363 = vmatpush1.msra.mxu0 0.0
    %1364 = vmatprep.subr.mxu0 0.0
    %1365 = vmatpush1.msra.mxu0 0.0
    %1366 = vmatprep.subr.mxu0 0.0
    %1367 = vmatpush1.msra.mxu0 0.0
    %1368 = vmatprep.subr.mxu0 0.0
    %1369 = vmatpush1.msra.mxu0 0.0
    %1370 = vmatprep.subr.mxu0 0.0
    %1371 = vmatpush1.msra.mxu0 0.0
    %1372 = vmatprep.subr.mxu0 0.0
    %1373 = vmatpush1.msra.mxu0 0.0
    %1374 = vmatprep.subr.mxu0 0.0
    %1375 = vmatpush1.msra.mxu0 0.0
    %1376 = vmatprep.subr.mxu0 0.0
    %1377 = vmatpush1.msra.mxu0 0.0
    %1378 = vmatprep.subr.mxu0 0.0
    %1379 = vmatpush1.msra.mxu0 0.0
    %1380 = vmatprep.subr.mxu0 0.0
    %1381 = vmatpush1.msra.mxu0 0.0
    %1382 = vmatprep.subr.mxu0 0.0
    %1383 = vmatpush1.msra.mxu0 0.0
    %1384 = vmatprep.subr.mxu0 0.0
    %1385 = vmatpush1.msra.mxu0 0.0
    %1386 = vmatprep.subr.mxu0 0.0
    %1387 = vmatpush1.msra.mxu0 0.0
    %1388 = vmatprep.subr.mxu0 0.0
    %1389 = vmatpush1.msra.mxu0 0.0
    %1390 = vmatprep.mubr.f32.mxu0 0.0
    %1391 = vmatmul.mubr.f32.gmra.mrb[0].mxu0 %v1324
    %v1392 = vpop.f32.mrb[0].mxu0
    %v1393 = vadd.f32 0.0, %v1392
    %v1394 = vpop.f32.mrb[0].mxu0
    %1395 = vdwg.mxu0
    %v1396 = vadd.f32 %v1090, %v1393
    %v1397 = vxor.u32 %v1396, 2147483648
    %v1398 = vmul.f32 %v1397, 1.442695
    %v1399 = vpow.pop %v1398
    %v1400 = vadd.f32 %v1399, 1.0
    %v1401 = vrcp.pop %v1400
    %v1402 = vmul.f32 1.0, %v1401
    %v1403 = vtanh.pop %v1396
    %v1404 = vmul.f32 %v1402, %v1311
    %1406 = vrot.lane.b32.xlu0 %v1403, 96
    %v1407 = vpop.permute.xlu0 %1406
    %v1409 = vmul.f32 %v1402, %v1407
    %1411 = vrot.lane.b32.xlu0 %v1409, 16
    %v1412 = vpop.permute.xlu0 %1411
    %v1414 = vadd.f32 %v1404, %v1412
    %v1415 = vtanh.pop %v1414
    %1417 = vrot.lane.b32.xlu0 %v1415, 32
    %v1418 = vpop.permute.xlu0 %1417
    %v1420 = vmul.f32 %v1402, %v1418
    %1422 = vrot.lane.b32.xlu0 %v1420, 80
    %v1423 = vpop.permute.xlu0 %1422
    %1425 = vst.msk [vmem:[#allocation4 + $0x2] sm:$0x1] %vm1217, %v1423
    %1426 = vst.msk [vmem:[#allocation4 + $0x9] sm:$0x2] %vm1219, %v1423
    %v1427 = vsel %vm159, %v1423, 0
    %1429 = vmatprep.subr.mxu0 0.0
    %1430 = vmatpush1.msra.mxu0 %v133
    %1431 = vmatprep.subr.mxu0 0.0
    %1432 = vmatpush1.msra.mxu0 %v134
    %1433 = vmatprep.subr.mxu0 0.0
    %1434 = vmatpush1.msra.mxu0 0.0
    %1435 = vmatprep.subr.mxu0 0.0
    %1436 = vmatpush1.msra.mxu0 0.0
    %1437 = vmatprep.subr.mxu0 0.0
    %1438 = vmatpush1.msra.mxu0 0.0
    %1439 = vmatprep.subr.mxu0 0.0
    %1440 = vmatpush1.msra.mxu0 0.0
    %1441 = vmatprep.subr.mxu0 0.0
    %1442 = vmatpush1.msra.mxu0 0.0
    %1443 = vmatprep.subr.mxu0 0.0
    %1444 = vmatpush1.msra.mxu0 0.0
    %1445 = vmatprep.subr.mxu0 0.0
    %1446 = vmatpush1.msra.mxu0 0.0
    %1447 = vmatprep.subr.mxu0 0.0
    %1448 = vmatpush1.msra.mxu0 0.0
    %1449 = vmatprep.subr.mxu0 0.0
    %1450 = vmatpush1.msra.mxu0 0.0
    %1451 = vmatprep.subr.mxu0 0.0
    %1452 = vmatpush1.msra.mxu0 0.0
    %1453 = vmatprep.subr.mxu0 0.0
    %1454 = vmatpush1.msra.mxu0 0.0
    %1455 = vmatprep.subr.mxu0 0.0
    %1456 = vmatpush1.msra.mxu0 0.0
    %1457 = vmatprep.subr.mxu0 0.0
    %1458 = vmatpush1.msra.mxu0 0.0
    %1459 = vmatprep.subr.mxu0 0.0
    %1460 = vmatpush1.msra.mxu0 0.0
    %1461 = vmatprep.subr.mxu0 0.0
    %1462 = vmatpush1.msra.mxu0 0.0
    %1463 = vmatprep.subr.mxu0 0.0
    %1464 = vmatpush1.msra.mxu0 0.0
    %1465 = vmatprep.subr.mxu0 0.0
    %1466 = vmatpush1.msra.mxu0 0.0
    %1467 = vmatprep.subr.mxu0 0.0
    %1468 = vmatpush1.msra.mxu0 0.0
    %1469 = vmatprep.subr.mxu0 0.0
    %1470 = vmatpush1.msra.mxu0 0.0
    %1471 = vmatprep.subr.mxu0 0.0
    %1472 = vmatpush1.msra.mxu0 0.0
    %1473 = vmatprep.subr.mxu0 0.0
    %1474 = vmatpush1.msra.mxu0 0.0
    %1475 = vmatprep.subr.mxu0 0.0
    %1476 = vmatpush1.msra.mxu0 0.0
    %1477 = vmatprep.subr.mxu0 0.0
    %1478 = vmatpush1.msra.mxu0 0.0
    %1479 = vmatprep.subr.mxu0 0.0
    %1480 = vmatpush1.msra.mxu0 0.0
    %1481 = vmatprep.subr.mxu0 0.0
    %1482 = vmatpush1.msra.mxu0 0.0
    %1483 = vmatprep.subr.mxu0 0.0
    %1484 = vmatpush1.msra.mxu0 0.0
    %1485 = vmatprep.subr.mxu0 0.0
    %1486 = vmatpush1.msra.mxu0 0.0
    %1487 = vmatprep.subr.mxu0 0.0
    %1488 = vmatpush1.msra.mxu0 0.0
    %1489 = vmatprep.subr.mxu0 0.0
    %1490 = vmatpush1.msra.mxu0 0.0
    %1491 = vmatprep.subr.mxu0 0.0
    %1492 = vmatpush1.msra.mxu0 0.0
    %1493 = vmatprep.mubr.f32.mxu0 0.0
    %1494 = vmatmul.mubr.f32.gmra.mrb[0].mxu0 %v1427
    %v1495 = vpop.f32.mrb[0].mxu0
    %v1496 = vadd.f32 0.0, %v1495
    %v1497 = vpop.f32.mrb[0].mxu0
    %1498 = vdwg.mxu0
    %v1499 = vadd.f32 %v1095, %v1496
    %v1500 = vxor.u32 %v1499, 2147483648
    %v1501 = vmul.f32 %v1500, 1.442695
    %v1502 = vpow.pop %v1501
    %v1503 = vadd.f32 %v1502, 1.0
    %v1504 = vrcp.pop %v1503
    %v1505 = vmul.f32 1.0, %v1504
    %v1506 = vtanh.pop %v1499
    %v1507 = vmul.f32 %v1505, %v1414
    %1509 = vrot.lane.b32.xlu0 %v1506, 96
    %v1510 = vpop.permute.xlu0 %1509
    %v1512 = vmul.f32 %v1505, %v1510
    %1514 = vrot.lane.b32.xlu0 %v1512, 16
    %v1515 = vpop.permute.xlu0 %1514
    %v1517 = vadd.f32 %v1507, %v1515
    %v1518 = vtanh.pop %v1517
    %1520 = vrot.lane.b32.xlu0 %v1518, 32
    %v1521 = vpop.permute.xlu0 %1520
    %v1523 = vmul.f32 %v1505, %v1521
    %1525 = vrot.lane.b32.xlu0 %v1523, 80
    %v1526 = vpop.permute.xlu0 %1525
    %1528 = vst.msk [vmem:[#allocation4 + $0x3] sm:$0x1] %vm1217, %v1526
    %1529 = vst.msk [vmem:[#allocation4 + $0xa] sm:$0x2] %vm1219, %v1526
    %v1530 = vsel %vm159, %v1526, 0
    %1532 = vmatprep.subr.mxu0 0.0
    %1533 = vmatpush1.msra.mxu0 %v133
    %1534 = vmatprep.subr.mxu0 0.0
    %1535 = vmatpush1.msra.mxu0 %v134
    %1536 = vmatprep.subr.mxu0 0.0
    %1537 = vmatpush1.msra.mxu0 0.0
    %1538 = vmatprep.subr.mxu0 0.0
    %1539 = vmatpush1.msra.mxu0 0.0
    %1540 = vmatprep.subr.mxu0 0.0
    %1541 = vmatpush1.msra.mxu0 0.0
    %1542 = vmatprep.subr.mxu0 0.0
    %1543 = vmatpush1.msra.mxu0 0.0
    %1544 = vmatprep.subr.mxu0 0.0
    %1545 = vmatpush1.msra.mxu0 0.0
    %1546 = vmatprep.subr.mxu0 0.0
    %1547 = vmatpush1.msra.mxu0 0.0
    %1548 = vmatprep.subr.mxu0 0.0
    %1549 = vmatpush1.msra.mxu0 0.0
    %1550 = vmatprep.subr.mxu0 0.0
    %1551 = vmatpush1.msra.mxu0 0.0
    %1552 = vmatprep.subr.mxu0 0.0
    %1553 = vmatpush1.msra.mxu0 0.0
    %1554 = vmatprep.subr.mxu0 0.0
    %1555 = vmatpush1.msra.mxu0 0.0
    %1556 = vmatprep.subr.mxu0 0.0
    %1557 = vmatpush1.msra.mxu0 0.0
    %1558 = vmatprep.subr.mxu0 0.0
    %1559 = vmatpush1.msra.mxu0 0.0
    %1560 = vmatprep.subr.mxu0 0.0
    %1561 = vmatpush1.msra.mxu0 0.0
    %1562 = vmatprep.subr.mxu0 0.0
    %1563 = vmatpush1.msra.mxu0 0.0
    %1564 = vmatprep.subr.mxu0 0.0
    %1565 = vmatpush1.msra.mxu0 0.0
    %1566 = vmatprep.subr.mxu0 0.0
    %1567 = vmatpush1.msra.mxu0 0.0
    %1568 = vmatprep.subr.mxu0 0.0
    %1569 = vmatpush1.msra.mxu0 0.0
    %1570 = vmatprep.subr.mxu0 0.0
    %1571 = vmatpush1.msra.mxu0 0.0
    %1572 = vmatprep.subr.mxu0 0.0
    %1573 = vmatpush1.msra.mxu0 0.0
    %1574 = vmatprep.subr.mxu0 0.0
    %1575 = vmatpush1.msra.mxu0 0.0
    %1576 = vmatprep.subr.mxu0 0.0
    %1577 = vmatpush1.msra.mxu0 0.0
    %1578 = vmatprep.subr.mxu0 0.0
    %1579 = vmatpush1.msra.mxu0 0.0
    %1580 = vmatprep.subr.mxu0 0.0
    %1581 = vmatpush1.msra.mxu0 0.0
    %1582 = vmatprep.subr.mxu0 0.0
    %1583 = vmatpush1.msra.mxu0 0.0
    %1584 = vmatprep.subr.mxu0 0.0
    %1585 = vmatpush1.msra.mxu0 0.0
    %1586 = vmatprep.subr.mxu0 0.0
    %1587 = vmatpush1.msra.mxu0 0.0
    %1588 = vmatprep.subr.mxu0 0.0
    %1589 = vmatpush1.msra.mxu0 0.0
    %1590 = vmatprep.subr.mxu0 0.0
    %1591 = vmatpush1.msra.mxu0 0.0
    %1592 = vmatprep.subr.mxu0 0.0
    %1593 = vmatpush1.msra.mxu0 0.0
    %1594 = vmatprep.subr.mxu0 0.0
    %1595 = vmatpush1.msra.mxu0 0.0
    %1596 = vmatprep.mubr.f32.mxu0 0.0
    %1597 = vmatmul.mubr.f32.gmra.mrb[0].mxu0 %v1530
    %v1598 = vpop.f32.mrb[0].mxu0
    %v1599 = vadd.f32 0.0, %v1598
    %v1600 = vpop.f32.mrb[0].mxu0
    %1601 = vdwg.mxu0
    %v1602 = vadd.f32 %v1100, %v1599
    %v1603 = vxor.u32 %v1602, 2147483648
    %v1604 = vmul.f32 %v1603, 1.442695
    %v1605 = vpow.pop %v1604
    %v1606 = vadd.f32 %v1605, 1.0
    %v1607 = vrcp.pop %v1606
    %v1608 = vmul.f32 1.0, %v1607
    %v1609 = vtanh.pop %v1602
    %v1610 = vmul.f32 %v1608, %v1517
    %1612 = vrot.lane.b32.xlu0 %v1609, 96
    %v1613 = vpop.permute.xlu0 %1612
    %v1615 = vmul.f32 %v1608, %v1613
    %1617 = vrot.lane.b32.xlu0 %v1615, 16
    %v1618 = vpop.permute.xlu0 %1617
    %v1620 = vadd.f32 %v1610, %v1618
    %v1621 = vtanh.pop %v1620
    %1623 = vrot.lane.b32.xlu0 %v1621, 32
    %v1624 = vpop.permute.xlu0 %1623
    %v1626 = vmul.f32 %v1608, %v1624
    %1628 = vrot.lane.b32.xlu0 %v1626, 80
    %v1629 = vpop.permute.xlu0 %1628
    %1631 = vst.msk [vmem:[#allocation4 + $0x4] sm:$0x1] %vm1217, %v1629
    %1632 = vst.msk [vmem:[#allocation4 + $0xb] sm:$0x2] %vm1219, %v1629
    %v1633 = vsel %vm159, %v1629, 0
    %1635 = vmatprep.subr.mxu0 0.0
    %1636 = vmatpush1.msra.mxu0 %v133
    %1637 = vmatprep.subr.mxu0 0.0
    %1638 = vmatpush1.msra.mxu0 %v134
    %1639 = vmatprep.subr.mxu0 0.0
    %1640 = vmatpush1.msra.mxu0 0.0
    %1641 = vmatprep.subr.mxu0 0.0
    %1642 = vmatpush1.msra.mxu0 0.0
    %1643 = vmatprep.subr.mxu0 0.0
    %1644 = vmatpush1.msra.mxu0 0.0
    %1645 = vmatprep.subr.mxu0 0.0
    %1646 = vmatpush1.msra.mxu0 0.0
    %1647 = vmatprep.subr.mxu0 0.0
    %1648 = vmatpush1.msra.mxu0 0.0
    %1649 = vmatprep.subr.mxu0 0.0
    %1650 = vmatpush1.msra.mxu0 0.0
    %1651 = vmatprep.subr.mxu0 0.0
    %1652 = vmatpush1.msra.mxu0 0.0
    %1653 = vmatprep.subr.mxu0 0.0
    %1654 = vmatpush1.msra.mxu0 0.0
    %1655 = vmatprep.subr.mxu0 0.0
    %1656 = vmatpush1.msra.mxu0 0.0
    %1657 = vmatprep.subr.mxu0 0.0
    %1658 = vmatpush1.msra.mxu0 0.0
    %1659 = vmatprep.subr.mxu0 0.0
    %1660 = vmatpush1.msra.mxu0 0.0
    %1661 = vmatprep.subr.mxu0 0.0
    %1662 = vmatpush1.msra.mxu0 0.0
    %1663 = vmatprep.subr.mxu0 0.0
    %1664 = vmatpush1.msra.mxu0 0.0
    %1665 = vmatprep.subr.mxu0 0.0
    %1666 = vmatpush1.msra.mxu0 0.0
    %1667 = vmatprep.subr.mxu0 0.0
    %1668 = vmatpush1.msra.mxu0 0.0
    %1669 = vmatprep.subr.mxu0 0.0
    %1670 = vmatpush1.msra.mxu0 0.0
    %1671 = vmatprep.subr.mxu0 0.0
    %1672 = vmatpush1.msra.mxu0 0.0
    %1673 = vmatprep.subr.mxu0 0.0
    %1674 = vmatpush1.msra.mxu0 0.0
    %1675 = vmatprep.subr.mxu0 0.0
    %1676 = vmatpush1.msra.mxu0 0.0
    %1677 = vmatprep.subr.mxu0 0.0
    %1678 = vmatpush1.msra.mxu0 0.0
    %1679 = vmatprep.subr.mxu0 0.0
    %1680 = vmatpush1.msra.mxu0 0.0
    %1681 = vmatprep.subr.mxu0 0.0
    %1682 = vmatpush1.msra.mxu0 0.0
    %1683 = vmatprep.subr.mxu0 0.0
    %1684 = vmatpush1.msra.mxu0 0.0
    %1685 = vmatprep.subr.mxu0 0.0
    %1686 = vmatpush1.msra.mxu0 0.0
    %1687 = vmatprep.subr.mxu0 0.0
    %1688 = vmatpush1.msra.mxu0 0.0
    %1689 = vmatprep.subr.mxu0 0.0
    %1690 = vmatpush1.msra.mxu0 0.0
    %1691 = vmatprep.subr.mxu0 0.0
    %1692 = vmatpush1.msra.mxu0 0.0
    %1693 = vmatprep.subr.mxu0 0.0
    %1694 = vmatpush1.msra.mxu0 0.0
    %1695 = vmatprep.subr.mxu0 0.0
    %1696 = vmatpush1.msra.mxu0 0.0
    %1697 = vmatprep.subr.mxu0 0.0
    %1698 = vmatpush1.msra.mxu0 0.0
    %1699 = vmatprep.mubr.f32.mxu0 0.0
    %1700 = vmatmul.mubr.f32.gmra.mrb[0].mxu0 %v1633
    %v1701 = vpop.f32.mrb[0].mxu0
    %v1702 = vadd.f32 0.0, %v1701
    %v1703 = vpop.f32.mrb[0].mxu0
    %1704 = vdwg.mxu0
    %v1705 = vadd.f32 %v1105, %v1702
    %v1706 = vxor.u32 %v1705, 2147483648
    %v1707 = vmul.f32 %v1706, 1.442695
    %v1708 = vpow.pop %v1707
    %v1709 = vadd.f32 %v1708, 1.0
    %v1710 = vrcp.pop %v1709
    %v1711 = vmul.f32 1.0, %v1710
    %v1712 = vtanh.pop %v1705
    %v1713 = vmul.f32 %v1711, %v1620
    %1715 = vrot.lane.b32.xlu0 %v1712, 96
    %v1716 = vpop.permute.xlu0 %1715
    %v1718 = vmul.f32 %v1711, %v1716
    %1720 = vrot.lane.b32.xlu0 %v1718, 16
    %v1721 = vpop.permute.xlu0 %1720
    %v1723 = vadd.f32 %v1713, %v1721
    %v1724 = vtanh.pop %v1723
    %1726 = vrot.lane.b32.xlu0 %v1724, 32
    %v1727 = vpop.permute.xlu0 %1726
    %v1729 = vmul.f32 %v1711, %v1727
    %1731 = vrot.lane.b32.xlu0 %v1729, 80
    %v1732 = vpop.permute.xlu0 %1731
    %1734 = vst.msk [vmem:[#allocation4 + $0x5] sm:$0x1] %vm1217, %v1732
    %1735 = vst.msk [vmem:[#allocation4 + $0xc] sm:$0x2] %vm1219, %v1732
    %v1736 = vsel %vm159, %v1732, 0
    %1738 = vmatprep.subr.mxu0 0.0
    %1739 = vmatpush1.msra.mxu0 %v133
    %1740 = vmatprep.subr.mxu0 0.0
    %1741 = vmatpush1.msra.mxu0 %v134
    %1742 = vmatprep.subr.mxu0 0.0
    %1743 = vmatpush1.msra.mxu0 0.0
    %1744 = vmatprep.subr.mxu0 0.0
    %1745 = vmatpush1.msra.mxu0 0.0
    %1746 = vmatprep.subr.mxu0 0.0
    %1747 = vmatpush1.msra.mxu0 0.0
    %1748 = vmatprep.subr.mxu0 0.0
    %1749 = vmatpush1.msra.mxu0 0.0
    %1750 = vmatprep.subr.mxu0 0.0
    %1751 = vmatpush1.msra.mxu0 0.0
    %1752 = vmatprep.subr.mxu0 0.0
    %1753 = vmatpush1.msra.mxu0 0.0
    %1754 = vmatprep.subr.mxu0 0.0
    %1755 = vmatpush1.msra.mxu0 0.0
    %1756 = vmatprep.subr.mxu0 0.0
    %1757 = vmatpush1.msra.mxu0 0.0
    %1758 = vmatprep.subr.mxu0 0.0
    %1759 = vmatpush1.msra.mxu0 0.0
    %1760 = vmatprep.subr.mxu0 0.0
    %1761 = vmatpush1.msra.mxu0 0.0
    %1762 = vmatprep.subr.mxu0 0.0
    %1763 = vmatpush1.msra.mxu0 0.0
    %1764 = vmatprep.subr.mxu0 0.0
    %1765 = vmatpush1.msra.mxu0 0.0
    %1766 = vmatprep.subr.mxu0 0.0
    %1767 = vmatpush1.msra.mxu0 0.0
    %1768 = vmatprep.subr.mxu0 0.0
    %1769 = vmatpush1.msra.mxu0 0.0
    %1770 = vmatprep.subr.mxu0 0.0
    %1771 = vmatpush1.msra.mxu0 0.0
    %1772 = vmatprep.subr.mxu0 0.0
    %1773 = vmatpush1.msra.mxu0 0.0
    %1774 = vmatprep.subr.mxu0 0.0
    %1775 = vmatpush1.msra.mxu0 0.0
    %1776 = vmatprep.subr.mxu0 0.0
    %1777 = vmatpush1.msra.mxu0 0.0
    %1778 = vmatprep.subr.mxu0 0.0
    %1779 = vmatpush1.msra.mxu0 0.0
    %1780 = vmatprep.subr.mxu0 0.0
    %1781 = vmatpush1.msra.mxu0 0.0
    %1782 = vmatprep.subr.mxu0 0.0
    %1783 = vmatpush1.msra.mxu0 0.0
    %1784 = vmatprep.subr.mxu0 0.0
    %1785 = vmatpush1.msra.mxu0 0.0
    %1786 = vmatprep.subr.mxu0 0.0
    %1787 = vmatpush1.msra.mxu0 0.0
    %1788 = vmatprep.subr.mxu0 0.0
    %1789 = vmatpush1.msra.mxu0 0.0
    %1790 = vmatprep.subr.mxu0 0.0
    %1791 = vmatpush1.msra.mxu0 0.0
    %1792 = vmatprep.subr.mxu0 0.0
    %1793 = vmatpush1.msra.mxu0 0.0
    %1794 = vmatprep.subr.mxu0 0.0
    %1795 = vmatpush1.msra.mxu0 0.0
    %1796 = vmatprep.subr.mxu0 0.0
    %1797 = vmatpush1.msra.mxu0 0.0
    %1798 = vmatprep.subr.mxu0 0.0
    %1799 = vmatpush1.msra.mxu0 0.0
    %1800 = vmatprep.subr.mxu0 0.0
    %1801 = vmatpush1.msra.mxu0 0.0
    %1802 = vmatprep.mubr.f32.mxu0 0.0
    %1803 = vmatmul.mubr.f32.gmra.mrb[0].mxu0 %v1736
    %v1804 = vpop.f32.mrb[0].mxu0
    %v1805 = vadd.f32 0.0, %v1804
    %v1806 = vpop.f32.mrb[0].mxu0
    %1807 = vdwg.mxu0
    %v1808 = vadd.f32 %v1110, %v1805
    %v1809 = vxor.u32 %v1808, 2147483648
    %v1810 = vmul.f32 %v1809, 1.442695
    %v1811 = vpow.pop %v1810
    %v1812 = vadd.f32 %v1811, 1.0
    %v1813 = vrcp.pop %v1812
    %v1814 = vmul.f32 1.0, %v1813
    %v1815 = vtanh.pop %v1808
    %v1816 = vmul.f32 %v1814, %v1723
    %1818 = vrot.lane.b32.xlu0 %v1815, 96
    %v1819 = vpop.permute.xlu0 %1818
    %v1821 = vmul.f32 %v1814, %v1819
    %1823 = vrot.lane.b32.xlu0 %v1821, 16
    %v1824 = vpop.permute.xlu0 %1823
    %v1826 = vadd.f32 %v1816, %v1824
    %v1827 = vtanh.pop %v1826
    %1829 = vrot.lane.b32.xlu0 %v1827, 32
    %v1830 = vpop.permute.xlu0 %1829
    %v1832 = vmul.f32 %v1814, %v1830
    %1834 = vrot.lane.b32.xlu0 %v1832, 80
    %v1835 = vpop.permute.xlu0 %1834
    %1837 = vst.msk [vmem:[#allocation4 + $0x6] sm:$0x1] %vm1217, %v1835
    %1838 = vst.msk [vmem:[#allocation4 + $0xd] sm:$0x2] %vm1219, %v1835
    %v1839 = vsel %vm159, %v1835, 0
    %1841 = vmatprep.subr.mxu0 0.0
    %1842 = vmatpush1.msra.mxu0 %v133
    %1843 = vmatprep.subr.mxu0 0.0
    %1844 = vmatpush1.msra.mxu0 %v134
    %1845 = vmatprep.subr.mxu0 0.0
    %1846 = vmatpush1.msra.mxu0 0.0
    %1847 = vmatprep.subr.mxu0 0.0
    %1848 = vmatpush1.msra.mxu0 0.0
    %1849 = vmatprep.subr.mxu0 0.0
    %1850 = vmatpush1.msra.mxu0 0.0
    %1851 = vmatprep.subr.mxu0 0.0
    %1852 = vmatpush1.msra.mxu0 0.0
    %1853 = vmatprep.subr.mxu0 0.0
    %1854 = vmatpush1.msra.mxu0 0.0
    %1855 = vmatprep.subr.mxu0 0.0
    %1856 = vmatpush1.msra.mxu0 0.0
    %1857 = vmatprep.subr.mxu0 0.0
    %1858 = vmatpush1.msra.mxu0 0.0
    %1859 = vmatprep.subr.mxu0 0.0
    %1860 = vmatpush1.msra.mxu0 0.0
    %1861 = vmatprep.subr.mxu0 0.0
    %1862 = vmatpush1.msra.mxu0 0.0
    %1863 = vmatprep.subr.mxu0 0.0
    %1864 = vmatpush1.msra.mxu0 0.0
    %1865 = vmatprep.subr.mxu0 0.0
    %1866 = vmatpush1.msra.mxu0 0.0
    %1867 = vmatprep.subr.mxu0 0.0
    %1868 = vmatpush1.msra.mxu0 0.0
    %1869 = vmatprep.subr.mxu0 0.0
    %1870 = vmatpush1.msra.mxu0 0.0
    %1871 = vmatprep.subr.mxu0 0.0
    %1872 = vmatpush1.msra.mxu0 0.0
    %1873 = vmatprep.subr.mxu0 0.0
    %1874 = vmatpush1.msra.mxu0 0.0
    %1875 = vmatprep.subr.mxu0 0.0
    %1876 = vmatpush1.msra.mxu0 0.0
    %1877 = vmatprep.subr.mxu0 0.0
    %1878 = vmatpush1.msra.mxu0 0.0
    %1879 = vmatprep.subr.mxu0 0.0
    %1880 = vmatpush1.msra.mxu0 0.0
    %1881 = vmatprep.subr.mxu0 0.0
    %1882 = vmatpush1.msra.mxu0 0.0
    %1883 = vmatprep.subr.mxu0 0.0
    %1884 = vmatpush1.msra.mxu0 0.0
    %1885 = vmatprep.subr.mxu0 0.0
    %1886 = vmatpush1.msra.mxu0 0.0
    %1887 = vmatprep.subr.mxu0 0.0
    %1888 = vmatpush1.msra.mxu0 0.0
    %1889 = vmatprep.subr.mxu0 0.0
    %1890 = vmatpush1.msra.mxu0 0.0
    %1891 = vmatprep.subr.mxu0 0.0
    %1892 = vmatpush1.msra.mxu0 0.0
    %1893 = vmatprep.subr.mxu0 0.0
    %1894 = vmatpush1.msra.mxu0 0.0
    %1895 = vmatprep.subr.mxu0 0.0
    %1896 = vmatpush1.msra.mxu0 0.0
    %1897 = vmatprep.subr.mxu0 0.0
    %1898 = vmatpush1.msra.mxu0 0.0
    %1899 = vmatprep.subr.mxu0 0.0
    %1900 = vmatpush1.msra.mxu0 0.0
    %1901 = vmatprep.subr.mxu0 0.0
    %1902 = vmatpush1.msra.mxu0 0.0
    %1903 = vmatprep.subr.mxu0 0.0
    %1904 = vmatpush1.msra.mxu0 0.0
    %1905 = vmatprep.mubr.f32.mxu0 0.0
    %1906 = vmatmul.mubr.f32.gmra.mrb[0].mxu0 %v1839
    %v1907 = vpop.f32.mrb[0].mxu0
    %v1908 = vadd.f32 0.0, %v1907
    %v1909 = vpop.f32.mrb[0].mxu0
    %1910 = vdwg.mxu0
    %v1911 = vadd.f32 %v1115, %v1908
    %v1912 = vxor.u32 %v1911, 2147483648
    %v1913 = vmul.f32 %v1912, 1.442695
    %v1914 = vpow.pop %v1913
    %v1915 = vadd.f32 %v1914, 1.0
    %v1916 = vrcp.pop %v1915
    %v1917 = vmul.f32 1.0, %v1916
    %v1918 = vtanh.pop %v1911
    %v1919 = vmul.f32 %v1917, %v1826
    %1921 = vrot.lane.b32.xlu0 %v1918, 96
    %v1922 = vpop.permute.xlu0 %1921
    %v1924 = vmul.f32 %v1917, %v1922
    %1926 = vrot.lane.b32.xlu0 %v1924, 16
    %v1927 = vpop.permute.xlu0 %1926
    %v1929 = vadd.f32 %v1919, %v1927
    %v1930 = vtanh.pop %v1929
    %1932 = vrot.lane.b32.xlu0 %v1930, 32
    %v1933 = vpop.permute.xlu0 %1932
    %v1935 = vmul.f32 %v1917, %v1933
    %1937 = vrot.lane.b32.xlu0 %v1935, 80
    %v1938 = vpop.permute.xlu0 %1937
    %1940 = vst.msk [vmem:[#allocation4 + $0x7] sm:$0x1] %vm1217, %v1938
    %1941 = vst.msk [vmem:[#allocation4 + $0xe] sm:$0x2] %vm1219, %v1938
    %v1942 = vld [vmem:[#allocation4] sm:$0xff]
    %v1943 = vld [vmem:[#allocation4 + $0x8] sm:$0xff]
    %v1944 = vlaneseq
    %v1945 = vshrl.u32 %v1944, 7
    %v1946 = vsub.s32 0, %v1945
    %v1947 = vrot.slane %v138, %v1946
    %v1949 = vsel %vm159, %v1942, 0
    %v1952 = vsel %vm159, %v1943, 0
    %1954 = vmatprep.subr.mxu0 0.0
    %1955 = vmatpush1.msra.mxu0 %v136
    %1956 = vmatprep.subr.mxu0 0.0
    %1957 = vmatpush1.msra.mxu0 %v137
    %1958 = vmatprep.subr.mxu0 0.0
    %1959 = vmatpush1.msra.mxu0 0.0
    %1960 = vmatprep.subr.mxu0 0.0
    %1961 = vmatpush1.msra.mxu0 0.0
    %1962 = vmatprep.subr.mxu0 0.0
    %1963 = vmatpush1.msra.mxu0 0.0
    %1964 = vmatprep.subr.mxu0 0.0
    %1965 = vmatpush1.msra.mxu0 0.0
    %1966 = vmatprep.subr.mxu0 0.0
    %1967 = vmatpush1.msra.mxu0 0.0
    %1968 = vmatprep.subr.mxu0 0.0
    %1969 = vmatpush1.msra.mxu0 0.0
    %1970 = vmatprep.subr.mxu0 0.0
    %1971 = vmatpush1.msra.mxu0 0.0
    %1972 = vmatprep.subr.mxu0 0.0
    %1973 = vmatpush1.msra.mxu0 0.0
    %1974 = vmatprep.subr.mxu0 0.0
    %1975 = vmatpush1.msra.mxu0 0.0
    %1976 = vmatprep.subr.mxu0 0.0
    %1977 = vmatpush1.msra.mxu0 0.0
    %1978 = vmatprep.subr.mxu0 0.0
    %1979 = vmatpush1.msra.mxu0 0.0
    %1980 = vmatprep.subr.mxu0 0.0
    %1981 = vmatpush1.msra.mxu0 0.0
    %1982 = vmatprep.subr.mxu0 0.0
    %1983 = vmatpush1.msra.mxu0 0.0
    %1984 = vmatprep.subr.mxu0 0.0
    %1985 = vmatpush1.msra.mxu0 0.0
    %1986 = vmatprep.subr.mxu0 0.0
    %1987 = vmatpush1.msra.mxu0 0.0
    %1988 = vmatprep.subr.mxu0 0.0
    %1989 = vmatpush1.msra.mxu0 0.0
    %1990 = vmatprep.subr.mxu0 0.0
    %1991 = vmatpush1.msra.mxu0 0.0
    %1992 = vmatprep.subr.mxu0 0.0
    %1993 = vmatpush1.msra.mxu0 0.0
    %1994 = vmatprep.subr.mxu0 0.0
    %1995 = vmatpush1.msra.mxu0 0.0
    %1996 = vmatprep.subr.mxu0 0.0
    %1997 = vmatpush1.msra.mxu0 0.0
    %1998 = vmatprep.subr.mxu0 0.0
    %1999 = vmatpush1.msra.mxu0 0.0
    %2000 = vmatprep.subr.mxu0 0.0
    %2001 = vmatpush1.msra.mxu0 0.0
    %2002 = vmatprep.subr.mxu0 0.0
    %2003 = vmatpush1.msra.mxu0 0.0
    %2004 = vmatprep.subr.mxu0 0.0
    %2005 = vmatpush1.msra.mxu0 0.0
    %2006 = vmatprep.subr.mxu0 0.0
    %2007 = vmatpush1.msra.mxu0 0.0
    %2008 = vmatprep.subr.mxu0 0.0
    %2009 = vmatpush1.msra.mxu0 0.0
    %2010 = vmatprep.subr.mxu0 0.0
    %2011 = vmatpush1.msra.mxu0 0.0
    %2012 = vmatprep.subr.mxu0 0.0
    %2013 = vmatpush1.msra.mxu0 0.0
    %2014 = vmatprep.subr.mxu0 0.0
    %2015 = vmatpush1.msra.mxu0 0.0
    %2016 = vmatprep.subr.mxu0 0.0
    %2017 = vmatpush1.msra.mxu0 0.0
    %2018 = vmatprep.mubr.f32.mxu0 0.0
    %2019 = vmatmul.mubr.f32.gmra.mrb[0].mxu0 %v1949
    %v2020 = vpop.f32.mrb[0].mxu0
    %v2021 = vadd.f32 %v1947, %v2020
    %v2022 = vpop.f32.mrb[0].mxu0
    %2023 = vmatprep.mubr.f32.mxu0 0.0
    %2024 = vmatmul.mubr.f32.gmra.mrb[0].mxu0 %v1952
    %v2025 = vpop.f32.mrb[0].mxu0
    %v2026 = vadd.f32 %v1947, %v2025
    %v2027 = vpop.f32.mrb[0].mxu0
    %2028 = vdwg.mxu0
    %2029 = vst [vmem:[#allocation12] sm:$0xff] %v2021
    %2030 = vst [vmem:[#allocation12 + $0x8] sm:$0xff] %v2026
    // Predicated region
    $region26: #{simple_lstm_forward.1} parent=1 // pred_check
      _
    $region27: #{simple_lstm_forward.1} parent=1 // pred_check_branch
      %2032 = sbr.rel (0) target = $region29
    $region28: #{simple_lstm_forward.1} parent=1 // pred_region
      %s2034 = ssub.s32 256, 256
      %2035 = vsyncadd [#allocation7], %s2034
      %s2036 = sshll.u32 [#allocation12], 4
      %s2037 = int_to_ptr.vmem [resolvable:$true] %s2036
      %2042 = dma.vmem_to_hbm [thread:$0]  %s2037, 256, %s3, [#allocation7], 128, 128, 8
    $region29: #{simple_lstm_forward.1} parent=1 // pred_fallthru
      _
    // Predicated region
    $region30: #{simple_lstm_forward.1} parent=1 // pred_check
      _
    $region31: #{simple_lstm_forward.1} parent=1 // pred_check_branch
      %2044 = sbr.rel (0) target = $region33
    $region32: #{simple_lstm_forward.1} parent=1 // pred_region
      %2045 = dma.done [#allocation7], 256
    $region33: #{simple_lstm_forward.1} parent=1 // pred_fallthru
      _
    %2046 = vsyncpa [#allocation6], 1
    %2047 = vsyncpa [#allocation11], 1
    %2048 = vsyncpa [#allocation7], 1
    %2049 = vsyncpa [#allocation8], 1

</llo_original>
